<compile_context>
chip_gen: v7x
topology: tpu7x:2x2x1
jax: 0.10.0
libtpu: 0.0.40
codegen_flags: <defaults>
</compile_context>

<pallas_src>
from math import sqrt

import jax
import jax.numpy as jnp
from jax import lax
from jax.experimental import pallas as pl
from jax.experimental.pallas import tpu as pltpu


def _layered_planar_flow_kernel(z_ref, w_ref, uh_ref, b_ref, d_ref, g_ref,
                                x_ref, ld_ref, t_ref):
    """One batch block.

    z_ref : (TB, D)  input samples
    w_ref : (L, D)   per-layer w
    uh_ref: (L, D)   per-layer constrained u_hat            (precomputed in wrapper)
    b_ref : (L, 1)   per-layer bias
    d_ref : (L, 1)   per-layer u_hat_l . w_l                (precomputed in wrapper)
    g_ref : (L, L)   coupling matrix G[m, l] = w_m . u_hat_l (precomputed in wrapper)
    x_ref : (TB, D)  output samples
    ld_ref: (1, TB)  summed log|det J| (lane-dense row)
    t_ref : (L, TB)  VMEM scratch holding tanh(h_l) rows
    """
    L = w_ref.shape[0]
    z0 = z_ref[...]                                              # (TB, D) f32

    # ---- prologue: all D-dimension work in one MXU contraction ---------------
    # h[l, b] = w_l . z0_b + b_l   (layer-major: L on sublanes, batch on lanes)
    h = lax.dot_general(
        w_ref[...], z0, (((1,), (1,)), ((), ())),
        preferred_element_type=jnp.float32,
        precision=lax.Precision.HIGHEST) + b_ref[...]           # (L, TB)

    g_all = g_ref[...]                                           # (L, L) hoisted load

    # ---- serial recurrence: tanh + rank-1 VPU FMA per layer, fully unrolled --
    for l in range(L):
        t_l = jnp.tanh(h[l:l + 1, :])                            # (1, TB)   EUP
        t_ref[l:l + 1, :] = t_l
        # h[m, :] += (w_m . u_hat_l) * tanh(h_l); only rows m > l are read later,
        # so the (cheap) full-height FMA is harmless.
        h = h + g_all[:, l:l + 1] * t_l                          # (L,1)*(1,TB) FMA

    t_all = t_ref[...]                                           # (L, TB)

    # ---- epilogue -------------------------------------------------------------
    # x = z0 + T^T @ U_hat   (one MXU contraction over the layer axis)
    x = z0 + lax.dot_general(
        t_all, uh_ref[...], (((0,), (0,)), ((), ())),
        preferred_element_type=jnp.float32,
        precision=lax.Precision.HIGHEST)                         # (TB, D)
    x_ref[...] = x.astype(x_ref.dtype)

    # sum_l log(|1 + (1 - tanh(h_l)^2) * (u_hat_l . w_l)| + eps), vectorized (L, TB)
    ld_ref[...] = jnp.sum(
        jnp.log(jnp.abs(1.0 + (1.0 - t_all * t_all) * d_ref[...]) + 1e-15),
        axis=0, keepdims=True)


def _pick_batch_tile(B):
    for t in (1024, 512, 256, 128):
        if B > t and B % t == 0:
            return t
    return B


def layered_planar_flow(z, u_all, w_all, b_all):
    """Pallas TPU implementation of LayeredPlanarFlow.forward.

    z:      (B, D) float32
    u_all:  (L, D) float32  (raw, unconstrained per-layer u)
    w_all:  (L, D) float32
    b_all:  (L,)   float32
    returns (x, log_det_sum) with shapes (B, D) and (B,)
    """
    z = z.astype(jnp.float32)
    u_all = u_all.astype(jnp.float32)
    w_all = w_all.astype(jnp.float32)
    b_all = b_all.astype(jnp.float32)
    B, D = z.shape
    L = u_all.shape[0]

    # ---- parameter-only precompute, hoisted off the serial in-kernel chain ----
    wu = jnp.sum(w_all * u_all, axis=-1, keepdims=True)               # (L, 1)
    m_wu = jax.nn.softplus(wu) - 1.0                                  # stable log(1+exp)-1
    w_norm_sq = jnp.sum(w_all * w_all, axis=-1, keepdims=True)        # (L, 1)
    u_hat = u_all + (m_wu - wu) * w_all / (w_norm_sq + 1e-15)         # (L, D)
    g = jnp.dot(w_all, u_hat.T,
                precision=lax.Precision.HIGHEST)                      # (L, L) G[m,l]=w_m.u_hat_l
    d_col = jnp.sum(u_hat * w_all, axis=-1, keepdims=True)            # (L, 1) u_hat_l.w_l
    b_col = b_all.reshape(L, 1)

    # ---- batch tiling: shard large batches across a parallel grid (both TCs on
    #      v7x); small / indivisible batches run as a single block.
    # TODO(synk): at very large B with small D, pack several batch tiles into one
    #             128-lane slab so the x stores become unmasked lane-dense vst.
    tb = _pick_batch_tile(B)
    grid = (B // tb,)

    x, ld = pl.pallas_call(
        _layered_planar_flow_kernel,
        out_shape=(
            jax.ShapeDtypeStruct((B, D), jnp.float32),
            jax.ShapeDtypeStruct((1, B), jnp.float32),
        ),
        grid=grid,
        in_specs=[
            pl.BlockSpec((tb, D), lambda i: (i, 0)),     # z       (batch-tiled)
            pl.BlockSpec((L, D), lambda i: (0, 0)),      # w       (resident)
            pl.BlockSpec((L, D), lambda i: (0, 0)),      # u_hat   (resident)
            pl.BlockSpec((L, 1), lambda i: (0, 0)),      # b       (resident)
            pl.BlockSpec((L, 1), lambda i: (0, 0)),      # u_hat.w (resident)
            pl.BlockSpec((L, L), lambda i: (0, 0)),      # G       (resident)
        ],
        out_specs=(
            pl.BlockSpec((tb, D), lambda i: (i, 0)),     # x
            pl.BlockSpec((1, tb), lambda i: (0, i)),     # log|det| (lane-dense row)
        ),
        scratch_shapes=[pltpu.VMEM((L, tb), jnp.float32)],   # tanh(h_l) rows
        compiler_params=pltpu.CompilerParams(
            dimension_semantics=("parallel",)),
    )(z, w_all, u_hat, b_col, d_col, g)
    return x, ld[0]


def _reference(z, u_all, w_all, b_all):
    """Plain-JAX reference mirroring the PyTorch module exactly (sequential form)."""
    ld = jnp.zeros((z.shape[0],), jnp.float32)
    for l in range(u_all.shape[0]):
        u, w, b = u_all[l], w_all[l], b_all[l]
        wu = jnp.dot(w, u)
        u_hat = u + (-1.0 + jnp.log(1.0 + jnp.exp(wu)) - wu) * (
            w / (jnp.sum(w * w) + 1e-15)
        )
        hidden = z @ w + b
        t = jnp.tanh(hidden)
        z = z + u_hat[None, :] * t[:, None]
        h_prime = 1.0 - t ** 2
        ld = ld + jnp.log(jnp.abs(1.0 + h_prime * jnp.dot(u_hat, w)) + 1e-15)
    return z, ld


def _check(B, D, L, seed):
    key = jax.random.PRNGKey(seed)
    kz, ku, kw, kb = jax.random.split(key, 4)
    scale = 1.0 / sqrt(D)

    z = jax.random.normal(kz, (B, D), jnp.float32)
    u_all = jax.random.uniform(ku, (L, D), dtype=jnp.float32) * scale
    w_all = jax.random.uniform(kw, (L, D), dtype=jnp.float32) * scale
    b_all = jax.random.uniform(kb, (L,), dtype=jnp.float32) * scale

    x, log_det = layered_planar_flow(z, u_all, w_all, b_all)
    x = jax.block_until_ready(x)
    log_det = jax.block_until_ready(log_det)

    x_ref, ld_ref = _reference(z, u_all, w_all, b_all)
    assert x.shape == (B, D) and log_det.shape == (B,)
    # Tolerance absorbs MXU f32 pass / reassociation differences of the restructured
    # (matmul-based) recurrence vs. the sequential reference; real bugs are O(0.1).
    assert jnp.allclose(x, x_ref, atol=1e-3, rtol=1e-3), \
        float(jnp.max(jnp.abs(x - x_ref)))
    assert jnp.allclose(log_det, ld_ref, atol=1e-3, rtol=1e-3), \
        float(jnp.max(jnp.abs(log_det - ld_ref)))


if __name__ == "__main__":
    # Small shape (single block, module-default flow_length=16).
    _check(B=8, D=32, L=16, seed=0)
    # Tiled shape (exercises the batch grid / parallel dimension).
    _check(B=1024, D=32, L=16, seed=0)
    print("KERNEL_OK")
</pallas_src>

<mosaic_0001>
module attributes {stable_mosaic.version = 11 : i64} {
  func.func @_layered_planar_flow_kernel(%arg0: i32, %arg1: memref<8x32xf32, #tpu.memory_space<vmem>>, %arg2: memref<16x32xf32, #tpu.memory_space<vmem>>, %arg3: memref<16x32xf32, #tpu.memory_space<vmem>>, %arg4: memref<16x1xf32, #tpu.memory_space<vmem>>, %arg5: memref<16x1xf32, #tpu.memory_space<vmem>>, %arg6: memref<16x16xf32, #tpu.memory_space<vmem>>, %arg7: memref<8x32xf32, #tpu.memory_space<vmem>>, %arg8: memref<1x8xf32, #tpu.memory_space<vmem>>, %arg9: memref<16x8xf32, #tpu.memory_space<vmem>>) attributes {dimension_semantics = [#tpu.dimension_semantics<parallel>], iteration_bounds = array<i64: 1>, scalar_prefetch = 0 : i64, scratch_operands = 1 : i64, tpu.core_type = #tpu.core_type<tc>, window_params = [{transform_indices = @transform_0, window_bounds = array<i64: 8, 32>}, {pipeline_mode = #tpu.pipeline_mode<synchronous>, transform_indices = @transform_1, window_bounds = array<i64: 16, 32>}, {pipeline_mode = #tpu.pipeline_mode<synchronous>, transform_indices = @transform_2, window_bounds = array<i64: 16, 32>}, {pipeline_mode = #tpu.pipeline_mode<synchronous>, transform_indices = @transform_3, window_bounds = array<i64: 16, 1>}, {pipeline_mode = #tpu.pipeline_mode<synchronous>, transform_indices = @transform_4, window_bounds = array<i64: 16, 1>}, {pipeline_mode = #tpu.pipeline_mode<synchronous>, transform_indices = @transform_5, window_bounds = array<i64: 16, 16>}, {transform_indices = @transform_6, window_bounds = array<i64: 8, 32>}, {transform_indices = @transform_7, window_bounds = array<i64: 1, 8>}]} {
    %c0 = arith.constant 0 : index
    %c0_0 = arith.constant 0 : index
    %0 = vector.load %arg1[%c0, %c0_0] : memref<8x32xf32, #tpu.memory_space<vmem>>, vector<8x32xf32>
    %c0_1 = arith.constant 0 : index
    %c0_2 = arith.constant 0 : index
    %1 = vector.load %arg2[%c0_1, %c0_2] : memref<16x32xf32, #tpu.memory_space<vmem>>, vector<16x32xf32>
    %cst = arith.constant dense<0.000000e+00> : vector<16x8xf32>
    %2 = tpu.matmul %1, %0, %cst {dimension_numbers = #tpu.dot_dimension_numbers<[1], [1], [0], [0], [0, 0, 1, 0], [], []>, precision = #tpu.contract_precision<fp32>} : vector<16x32xf32>, vector<8x32xf32>, vector<16x8xf32> -> vector<16x8xf32>
    %c0_3 = arith.constant 0 : index
    %c0_4 = arith.constant 0 : index
    %3 = vector.load %arg4[%c0_3, %c0_4] : memref<16x1xf32, #tpu.memory_space<vmem>>, vector<16x1xf32>
    %4 = vector.broadcast %3 : vector<16x1xf32> to vector<16x8xf32>
    %5 = arith.addf %2, %4 : vector<16x8xf32>
    %c0_5 = arith.constant 0 : index
    %c0_6 = arith.constant 0 : index
    %6 = vector.load %arg6[%c0_5, %c0_6] : memref<16x16xf32, #tpu.memory_space<vmem>>, vector<16x16xf32>
    %7 = vector.extract_strided_slice %5 {offsets = [0, 0], sizes = [1, 8], strides = [1, 1]} : vector<16x8xf32> to vector<1x8xf32>
    %8 = math.tanh %7 : vector<1x8xf32>
    %c0_7 = arith.constant 0 : index
    %c0_8 = arith.constant 0 : index
    %9 = vector.load %arg9[%c0_7, %c0_8] : memref<16x8xf32, #tpu.memory_space<vmem>>, vector<1x8xf32>
    tpu.vector_store %arg9[%c0_7, %c0_8], %8 {strides = array<i32>} : memref<16x8xf32, #tpu.memory_space<vmem>>, vector<1x8xf32>,
    %10 = vector.extract_strided_slice %6 {offsets = [0, 0], sizes = [16, 1], strides = [1, 1]} : vector<16x16xf32> to vector<16x1xf32>
    %11 = vector.broadcast %10 : vector<16x1xf32> to vector<16x8xf32>
    %12 = vector.broadcast %8 : vector<1x8xf32> to vector<16x8xf32>
    %13 = arith.mulf %11, %12 : vector<16x8xf32>
    %14 = arith.addf %5, %13 : vector<16x8xf32>
    %15 = vector.extract_strided_slice %14 {offsets = [1, 0], sizes = [1, 8], strides = [1, 1]} : vector<16x8xf32> to vector<1x8xf32>
    %16 = math.tanh %15 : vector<1x8xf32>
    %c1 = arith.constant 1 : index
    %c0_9 = arith.constant 0 : index
    %17 = vector.load %arg9[%c1, %c0_9] : memref<16x8xf32, #tpu.memory_space<vmem>>, vector<1x8xf32>
    tpu.vector_store %arg9[%c1, %c0_9], %16 {strides = array<i32>} : memref<16x8xf32, #tpu.memory_space<vmem>>, vector<1x8xf32>,
    %18 = vector.extract_strided_slice %6 {offsets = [0, 1], sizes = [16, 1], strides = [1, 1]} : vector<16x16xf32> to vector<16x1xf32>
    %19 = vector.broadcast %18 : vector<16x1xf32> to vector<16x8xf32>
    %20 = vector.broadcast %16 : vector<1x8xf32> to vector<16x8xf32>
    %21 = arith.mulf %19, %20 : vector<16x8xf32>
    %22 = arith.addf %14, %21 : vector<16x8xf32>
    %23 = vector.extract_strided_slice %22 {offsets = [2, 0], sizes = [1, 8], strides = [1, 1]} : vector<16x8xf32> to vector<1x8xf32>
    %24 = math.tanh %23 : vector<1x8xf32>
    %c2 = arith.constant 2 : index
    %c0_10 = arith.constant 0 : index
    %25 = vector.load %arg9[%c2, %c0_10] : memref<16x8xf32, #tpu.memory_space<vmem>>, vector<1x8xf32>
    tpu.vector_store %arg9[%c2, %c0_10], %24 {strides = array<i32>} : memref<16x8xf32, #tpu.memory_space<vmem>>, vector<1x8xf32>,
    %26 = vector.extract_strided_slice %6 {offsets = [0, 2], sizes = [16, 1], strides = [1, 1]} : vector<16x16xf32> to vector<16x1xf32>
    %27 = vector.broadcast %26 : vector<16x1xf32> to vector<16x8xf32>
    %28 = vector.broadcast %24 : vector<1x8xf32> to vector<16x8xf32>
    %29 = arith.mulf %27, %28 : vector<16x8xf32>
    %30 = arith.addf %22, %29 : vector<16x8xf32>
    %31 = vector.extract_strided_slice %30 {offsets = [3, 0], sizes = [1, 8], strides = [1, 1]} : vector<16x8xf32> to vector<1x8xf32>
    %32 = math.tanh %31 : vector<1x8xf32>
    %c3 = arith.constant 3 : index
    %c0_11 = arith.constant 0 : index
    %33 = vector.load %arg9[%c3, %c0_11] : memref<16x8xf32, #tpu.memory_space<vmem>>, vector<1x8xf32>
    tpu.vector_store %arg9[%c3, %c0_11], %32 {strides = array<i32>} : memref<16x8xf32, #tpu.memory_space<vmem>>, vector<1x8xf32>,
    %34 = vector.extract_strided_slice %6 {offsets = [0, 3], sizes = [16, 1], strides = [1, 1]} : vector<16x16xf32> to vector<16x1xf32>
    %35 = vector.broadcast %34 : vector<16x1xf32> to vector<16x8xf32>
    %36 = vector.broadcast %32 : vector<1x8xf32> to vector<16x8xf32>
    %37 = arith.mulf %35, %36 : vector<16x8xf32>
    %38 = arith.addf %30, %37 : vector<16x8xf32>
    %39 = vector.extract_strided_slice %38 {offsets = [4, 0], sizes = [1, 8], strides = [1, 1]} : vector<16x8xf32> to vector<1x8xf32>
    %40 = math.tanh %39 : vector<1x8xf32>
    %c4 = arith.constant 4 : index
    %c0_12 = arith.constant 0 : index
    %41 = vector.load %arg9[%c4, %c0_12] : memref<16x8xf32, #tpu.memory_space<vmem>>, vector<1x8xf32>
    tpu.vector_store %arg9[%c4, %c0_12], %40 {strides = array<i32>} : memref<16x8xf32, #tpu.memory_space<vmem>>, vector<1x8xf32>,
    %42 = vector.extract_strided_slice %6 {offsets = [0, 4], sizes = [16, 1], strides = [1, 1]} : vector<16x16xf32> to vector<16x1xf32>
    %43 = vector.broadcast %42 : vector<16x1xf32> to vector<16x8xf32>
    %44 = vector.broadcast %40 : vector<1x8xf32> to vector<16x8xf32>
    %45 = arith.mulf %43, %44 : vector<16x8xf32>
    %46 = arith.addf %38, %45 : vector<16x8xf32>
    %47 = vector.extract_strided_slice %46 {offsets = [5, 0], sizes = [1, 8], strides = [1, 1]} : vector<16x8xf32> to vector<1x8xf32>
    %48 = math.tanh %47 : vector<1x8xf32>
    %c5 = arith.constant 5 : index
    %c0_13 = arith.constant 0 : index
    %49 = vector.load %arg9[%c5, %c0_13] : memref<16x8xf32, #tpu.memory_space<vmem>>, vector<1x8xf32>
    tpu.vector_store %arg9[%c5, %c0_13], %48 {strides = array<i32>} : memref<16x8xf32, #tpu.memory_space<vmem>>, vector<1x8xf32>,
    %50 = vector.extract_strided_slice %6 {offsets = [0, 5], sizes = [16, 1], strides = [1, 1]} : vector<16x16xf32> to vector<16x1xf32>
    %51 = vector.broadcast %50 : vector<16x1xf32> to vector<16x8xf32>
    %52 = vector.broadcast %48 : vector<1x8xf32> to vector<16x8xf32>
    %53 = arith.mulf %51, %52 : vector<16x8xf32>
    %54 = arith.addf %46, %53 : vector<16x8xf32>
    %55 = vector.extract_strided_slice %54 {offsets = [6, 0], sizes = [1, 8], strides = [1, 1]} : vector<16x8xf32> to vector<1x8xf32>
    %56 = math.tanh %55 : vector<1x8xf32>
    %c6 = arith.constant 6 : index
    %c0_14 = arith.constant 0 : index
    %57 = vector.load %arg9[%c6, %c0_14] : memref<16x8xf32, #tpu.memory_space<vmem>>, vector<1x8xf32>
    tpu.vector_store %arg9[%c6, %c0_14], %56 {strides = array<i32>} : memref<16x8xf32, #tpu.memory_space<vmem>>, vector<1x8xf32>,
    %58 = vector.extract_strided_slice %6 {offsets = [0, 6], sizes = [16, 1], strides = [1, 1]} : vector<16x16xf32> to vector<16x1xf32>
    %59 = vector.broadcast %58 : vector<16x1xf32> to vector<16x8xf32>
    %60 = vector.broadcast %56 : vector<1x8xf32> to vector<16x8xf32>
    %61 = arith.mulf %59, %60 : vector<16x8xf32>
    %62 = arith.addf %54, %61 : vector<16x8xf32>
    %63 = vector.extract_strided_slice %62 {offsets = [7, 0], sizes = [1, 8], strides = [1, 1]} : vector<16x8xf32> to vector<1x8xf32>
    %64 = math.tanh %63 : vector<1x8xf32>
    %c7 = arith.constant 7 : index
    %c0_15 = arith.constant 0 : index
    %65 = vector.load %arg9[%c7, %c0_15] : memref<16x8xf32, #tpu.memory_space<vmem>>, vector<1x8xf32>
    tpu.vector_store %arg9[%c7, %c0_15], %64 {strides = array<i32>} : memref<16x8xf32, #tpu.memory_space<vmem>>, vector<1x8xf32>,
    %66 = vector.extract_strided_slice %6 {offsets = [0, 7], sizes = [16, 1], strides = [1, 1]} : vector<16x16xf32> to vector<16x1xf32>
    %67 = vector.broadcast %66 : vector<16x1xf32> to vector<16x8xf32>
    %68 = vector.broadcast %64 : vector<1x8xf32> to vector<16x8xf32>
    %69 = arith.mulf %67, %68 : vector<16x8xf32>
    %70 = arith.addf %62, %69 : vector<16x8xf32>
    %71 = vector.extract_strided_slice %70 {offsets = [8, 0], sizes = [1, 8], strides = [1, 1]} : vector<16x8xf32> to vector<1x8xf32>
    %72 = math.tanh %71 : vector<1x8xf32>
    %c8 = arith.constant 8 : index
    %c0_16 = arith.constant 0 : index
    %73 = vector.load %arg9[%c8, %c0_16] : memref<16x8xf32, #tpu.memory_space<vmem>>, vector<1x8xf32>
    tpu.vector_store %arg9[%c8, %c0_16], %72 {strides = array<i32>} : memref<16x8xf32, #tpu.memory_space<vmem>>, vector<1x8xf32>,
    %74 = vector.extract_strided_slice %6 {offsets = [0, 8], sizes = [16, 1], strides = [1, 1]} : vector<16x16xf32> to vector<16x1xf32>
    %75 = vector.broadcast %74 : vector<16x1xf32> to vector<16x8xf32>
    %76 = vector.broadcast %72 : vector<1x8xf32> to vector<16x8xf32>
    %77 = arith.mulf %75, %76 : vector<16x8xf32>
    %78 = arith.addf %70, %77 : vector<16x8xf32>
    %79 = vector.extract_strided_slice %78 {offsets = [9, 0], sizes = [1, 8], strides = [1, 1]} : vector<16x8xf32> to vector<1x8xf32>
    %80 = math.tanh %79 : vector<1x8xf32>
    %c9 = arith.constant 9 : index
    %c0_17 = arith.constant 0 : index
    %81 = vector.load %arg9[%c9, %c0_17] : memref<16x8xf32, #tpu.memory_space<vmem>>, vector<1x8xf32>
    tpu.vector_store %arg9[%c9, %c0_17], %80 {strides = array<i32>} : memref<16x8xf32, #tpu.memory_space<vmem>>, vector<1x8xf32>,
    %82 = vector.extract_strided_slice %6 {offsets = [0, 9], sizes = [16, 1], strides = [1, 1]} : vector<16x16xf32> to vector<16x1xf32>
    %83 = vector.broadcast %82 : vector<16x1xf32> to vector<16x8xf32>
    %84 = vector.broadcast %80 : vector<1x8xf32> to vector<16x8xf32>
    %85 = arith.mulf %83, %84 : vector<16x8xf32>
    %86 = arith.addf %78, %85 : vector<16x8xf32>
    %87 = vector.extract_strided_slice %86 {offsets = [10, 0], sizes = [1, 8], strides = [1, 1]} : vector<16x8xf32> to vector<1x8xf32>
    %88 = math.tanh %87 : vector<1x8xf32>
    %c10 = arith.constant 10 : index
    %c0_18 = arith.constant 0 : index
    %89 = vector.load %arg9[%c10, %c0_18] : memref<16x8xf32, #tpu.memory_space<vmem>>, vector<1x8xf32>
    tpu.vector_store %arg9[%c10, %c0_18], %88 {strides = array<i32>} : memref<16x8xf32, #tpu.memory_space<vmem>>, vector<1x8xf32>,
    %90 = vector.extract_strided_slice %6 {offsets = [0, 10], sizes = [16, 1], strides = [1, 1]} : vector<16x16xf32> to vector<16x1xf32>
    %91 = vector.broadcast %90 : vector<16x1xf32> to vector<16x8xf32>
    %92 = vector.broadcast %88 : vector<1x8xf32> to vector<16x8xf32>
    %93 = arith.mulf %91, %92 : vector<16x8xf32>
    %94 = arith.addf %86, %93 : vector<16x8xf32>
    %95 = vector.extract_strided_slice %94 {offsets = [11, 0], sizes = [1, 8], strides = [1, 1]} : vector<16x8xf32> to vector<1x8xf32>
    %96 = math.tanh %95 : vector<1x8xf32>
    %c11 = arith.constant 11 : index
    %c0_19 = arith.constant 0 : index
    %97 = vector.load %arg9[%c11, %c0_19] : memref<16x8xf32, #tpu.memory_space<vmem>>, vector<1x8xf32>
    tpu.vector_store %arg9[%c11, %c0_19], %96 {strides = array<i32>} : memref<16x8xf32, #tpu.memory_space<vmem>>, vector<1x8xf32>,
    %98 = vector.extract_strided_slice %6 {offsets = [0, 11], sizes = [16, 1], strides = [1, 1]} : vector<16x16xf32> to vector<16x1xf32>
    %99 = vector.broadcast %98 : vector<16x1xf32> to vector<16x8xf32>
    %100 = vector.broadcast %96 : vector<1x8xf32> to vector<16x8xf32>
    %101 = arith.mulf %99, %100 : vector<16x8xf32>
    %102 = arith.addf %94, %101 : vector<16x8xf32>
    %103 = vector.extract_strided_slice %102 {offsets = [12, 0], sizes = [1, 8], strides = [1, 1]} : vector<16x8xf32> to vector<1x8xf32>
    %104 = math.tanh %103 : vector<1x8xf32>
    %c12 = arith.constant 12 : index
    %c0_20 = arith.constant 0 : index
    %105 = vector.load %arg9[%c12, %c0_20] : memref<16x8xf32, #tpu.memory_space<vmem>>, vector<1x8xf32>
    tpu.vector_store %arg9[%c12, %c0_20], %104 {strides = array<i32>} : memref<16x8xf32, #tpu.memory_space<vmem>>, vector<1x8xf32>,
    %106 = vector.extract_strided_slice %6 {offsets = [0, 12], sizes = [16, 1], strides = [1, 1]} : vector<16x16xf32> to vector<16x1xf32>
    %107 = vector.broadcast %106 : vector<16x1xf32> to vector<16x8xf32>
    %108 = vector.broadcast %104 : vector<1x8xf32> to vector<16x8xf32>
    %109 = arith.mulf %107, %108 : vector<16x8xf32>
    %110 = arith.addf %102, %109 : vector<16x8xf32>
    %111 = vector.extract_strided_slice %110 {offsets = [13, 0], sizes = [1, 8], strides = [1, 1]} : vector<16x8xf32> to vector<1x8xf32>
    %112 = math.tanh %111 : vector<1x8xf32>
    %c13 = arith.constant 13 : index
    %c0_21 = arith.constant 0 : index
    %113 = vector.load %arg9[%c13, %c0_21] : memref<16x8xf32, #tpu.memory_space<vmem>>, vector<1x8xf32>
    tpu.vector_store %arg9[%c13, %c0_21], %112 {strides = array<i32>} : memref<16x8xf32, #tpu.memory_space<vmem>>, vector<1x8xf32>,
    %114 = vector.extract_strided_slice %6 {offsets = [0, 13], sizes = [16, 1], strides = [1, 1]} : vector<16x16xf32> to vector<16x1xf32>
    %115 = vector.broadcast %114 : vector<16x1xf32> to vector<16x8xf32>
    %116 = vector.broadcast %112 : vector<1x8xf32> to vector<16x8xf32>
    %117 = arith.mulf %115, %116 : vector<16x8xf32>
    %118 = arith.addf %110, %117 : vector<16x8xf32>
    %119 = vector.extract_strided_slice %118 {offsets = [14, 0], sizes = [1, 8], strides = [1, 1]} : vector<16x8xf32> to vector<1x8xf32>
    %120 = math.tanh %119 : vector<1x8xf32>
    %c14 = arith.constant 14 : index
    %c0_22 = arith.constant 0 : index
    %121 = vector.load %arg9[%c14, %c0_22] : memref<16x8xf32, #tpu.memory_space<vmem>>, vector<1x8xf32>
    tpu.vector_store %arg9[%c14, %c0_22], %120 {strides = array<i32>} : memref<16x8xf32, #tpu.memory_space<vmem>>, vector<1x8xf32>,
    %122 = vector.extract_strided_slice %6 {offsets = [0, 14], sizes = [16, 1], strides = [1, 1]} : vector<16x16xf32> to vector<16x1xf32>
    %123 = vector.broadcast %122 : vector<16x1xf32> to vector<16x8xf32>
    %124 = vector.broadcast %120 : vector<1x8xf32> to vector<16x8xf32>
    %125 = arith.mulf %123, %124 : vector<16x8xf32>
    %126 = arith.addf %118, %125 : vector<16x8xf32>
    %127 = vector.extract_strided_slice %126 {offsets = [15, 0], sizes = [1, 8], strides = [1, 1]} : vector<16x8xf32> to vector<1x8xf32>
    %128 = math.tanh %127 : vector<1x8xf32>
    %c15 = arith.constant 15 : index
    %c0_23 = arith.constant 0 : index
    %129 = vector.load %arg9[%c15, %c0_23] : memref<16x8xf32, #tpu.memory_space<vmem>>, vector<1x8xf32>
    tpu.vector_store %arg9[%c15, %c0_23], %128 {strides = array<i32>} : memref<16x8xf32, #tpu.memory_space<vmem>>, vector<1x8xf32>,
    %c0_24 = arith.constant 0 : index
    %c0_25 = arith.constant 0 : index
    %130 = vector.load %arg9[%c0_24, %c0_25] : memref<16x8xf32, #tpu.memory_space<vmem>>, vector<16x8xf32>
    %c0_26 = arith.constant 0 : index
    %c0_27 = arith.constant 0 : index
    %131 = vector.load %arg3[%c0_26, %c0_27] : memref<16x32xf32, #tpu.memory_space<vmem>>, vector<16x32xf32>
    %cst_28 = arith.constant dense<0.000000e+00> : vector<8x32xf32>
    %132 = tpu.matmul %130, %131, %cst_28 {dimension_numbers = #tpu.dot_dimension_numbers<[0], [0], [1], [1], [0, 1, 1, 1], [], []>, precision = #tpu.contract_precision<fp32>} : vector<16x8xf32>, vector<16x32xf32>, vector<8x32xf32> -> vector<8x32xf32>
    %133 = arith.addf %0, %132 : vector<8x32xf32>
    %c0_29 = arith.constant 0 : index
    %c0_30 = arith.constant 0 : index
    %134 = vector.load %arg7[%c0_29, %c0_30] : memref<8x32xf32, #tpu.memory_space<vmem>>, vector<8x32xf32>
    tpu.vector_store %arg7[%c0_29, %c0_30], %133 {strides = array<i32>} : memref<8x32xf32, #tpu.memory_space<vmem>>, vector<8x32xf32>,
    %135 = arith.mulf %130, %130 : vector<16x8xf32>
    %cst_31 = arith.constant 1.000000e+00 : f32
    %136 = vector.broadcast %cst_31 : f32 to vector<16x8xf32>
    %137 = arith.subf %136, %135 : vector<16x8xf32>
    %c0_32 = arith.constant 0 : index
    %c0_33 = arith.constant 0 : index
    %138 = vector.load %arg5[%c0_32, %c0_33] : memref<16x1xf32, #tpu.memory_space<vmem>>, vector<16x1xf32>
    %139 = vector.broadcast %138 : vector<16x1xf32> to vector<16x8xf32>
    %140 = arith.mulf %137, %139 : vector<16x8xf32>
    %cst_34 = arith.constant 1.000000e+00 : f32
    %141 = vector.broadcast %cst_34 : f32 to vector<16x8xf32>
    %142 = arith.addf %141, %140 : vector<16x8xf32>
    %143 = math.absf %142 : vector<16x8xf32>
    %cst_35 = arith.constant 1.000000e-15 : f32
    %144 = vector.broadcast %cst_35 : f32 to vector<16x8xf32>
    %145 = arith.addf %143, %144 : vector<16x8xf32>
    %146 = math.log %145 : vector<16x8xf32>
    %cst_36 = arith.constant dense<0.000000e+00> : vector<8xf32>
    %147 = vector.multi_reduction <add>, %146, %cst_36 [0] : vector<16x8xf32> to vector<8xf32>
    %148 = vector.shape_cast %147 : vector<8xf32> to vector<1x8xf32>
    %c0_37 = arith.constant 0 : index
    %c0_38 = arith.constant 0 : index
    %149 = vector.load %arg8[%c0_37, %c0_38] : memref<1x8xf32, #tpu.memory_space<vmem>>, vector<1x8xf32>
    tpu.vector_store %arg8[%c0_37, %c0_38], %148 {strides = array<i32>} : memref<1x8xf32, #tpu.memory_space<vmem>>, vector<1x8xf32>,
    return
  }
  func.func @transform_0(%arg0: i32) -> (i32, i32) {
    %c0_i32 = arith.constant 0 : i32
    %c0_i32_0 = arith.constant 0 : i32
    return %arg0, %c0_i32 : i32, i32
  }
  func.func @transform_1(%arg0: i32) -> (i32, i32) {
    %c0_i32 = arith.constant 0 : i32
    %c0_i32_0 = arith.constant 0 : i32
    %c0_i32_1 = arith.constant 0 : i32
    return %c0_i32, %c0_i32_0 : i32, i32
  }
  func.func @transform_2(%arg0: i32) -> (i32, i32) {
    %c0_i32 = arith.constant 0 : i32
    %c0_i32_0 = arith.constant 0 : i32
    %c0_i32_1 = arith.constant 0 : i32
    return %c0_i32, %c0_i32_0 : i32, i32
  }
  func.func @transform_3(%arg0: i32) -> (i32, i32) {
    %c0_i32 = arith.constant 0 : i32
    %c0_i32_0 = arith.constant 0 : i32
    %c0_i32_1 = arith.constant 0 : i32
    return %c0_i32, %c0_i32_0 : i32, i32
  }
  func.func @transform_4(%arg0: i32) -> (i32, i32) {
    %c0_i32 = arith.constant 0 : i32
    %c0_i32_0 = arith.constant 0 : i32
    %c0_i32_1 = arith.constant 0 : i32
    return %c0_i32, %c0_i32_0 : i32, i32
  }
  func.func @transform_5(%arg0: i32) -> (i32, i32) {
    %c0_i32 = arith.constant 0 : i32
    %c0_i32_0 = arith.constant 0 : i32
    %c0_i32_1 = arith.constant 0 : i32
    return %c0_i32, %c0_i32_0 : i32, i32
  }
  func.func @transform_6(%arg0: i32) -> (i32, i32) {
    %c0_i32 = arith.constant 0 : i32
    %c0_i32_0 = arith.constant 0 : i32
    return %arg0, %c0_i32 : i32, i32
  }
  func.func @transform_7(%arg0: i32) -> (i32, i32) {
    %c0_i32 = arith.constant 0 : i32
    %c0_i32_0 = arith.constant 0 : i32
    return %c0_i32, %arg0 : i32, i32
  }
}

</mosaic_0001>

<llo_original>
// kernel: tpu_custom_call.1
$region0: #{tpu_custom_call.1}
  #allocation0 [shape = 'u32[]', space=smem, size = 0x4, offset = 0x4, fixed_abs, tag = 'smem constant byte address 0x4 - core index']
  #allocation1 [shape = 'u32[144,128]{1,0:T(1,128)}', space=vmem, size = 0x12000, scoped, tag = 'internal scratch']
  #allocation2 [shape = 'f32[16,8]{1,0:T(8,128)}', space=vmem, size = 0x2000, scoped, tag = 'scratch operand']
  %s0 = inlined_call_operand.hbm [shape: f32[8,32], index: 0, kind: input, shape index: {}]
  %s1 = inlined_call_operand.vmem [shape: f32[16,32], index: 1, kind: input, shape index: {}]
  %s2 = inlined_call_operand.vmem [shape: f32[16,32], index: 2, kind: input, shape index: {}]
  %s3 = inlined_call_operand.vmem [shape: f32[16,1], index: 3, kind: input, shape index: {}]
  %s4 = inlined_call_operand.vmem [shape: f32[16,1], index: 4, kind: input, shape index: {}]
  %s5 = inlined_call_operand.vmem [shape: f32[16,16], index: 5, kind: input, shape index: {}]
  %s6 = inlined_call_operand.hbm [shape: f32[8,32], index: 6, kind: output, shape index: {0}]
  %s7 = inlined_call_operand.hbm [shape: f32[1,8], index: 7, kind: output, shape index: {1}]
  %8 = xla_tuple %s6, %s7
  %s9 = sld [smem:[#allocation0]]
  $region46: #{tpu_custom_call.1} parent=0
    _
  %s11 = ssub.s32 1, %s9
  %s12 = scalar_select 0, %s11, %s9
  $region1: #{tpu_custom_call.1} parent=0
    #allocation3 [shape = 'u8[4096]{0}', space=vmem, size = 0x1000, scoped, tag = 'input window, operand 0, single buffered']
    #allocation4 [shape = 's32[1]{0}', space=sflag, size = 0x4, scoped, tag = 'scoped memory for tpu_custom_call.1']
    #allocation5 [shape = 's32[1]{0}', space=sflag, size = 0x4, scoped, tag = 'scoped memory for tpu_custom_call.1']
    #allocation6 [shape = 'u8[4096]{0}', space=vmem, size = 0x1000, scoped, tag = 'output window, operand 0, single buffered']
    #allocation7 [shape = 'u8[512]{0}', space=vmem, size = 0x400, scoped, tag = 'output window, operand 1, single buffered']
    #allocation8 [shape = 's32[1]{0}', space=sflag, size = 0x4, scoped, tag = 'scoped memory for tpu_custom_call.1']
    %13 = vsyncpa [#allocation4], 0
    %14 = vsyncpa [#allocation5], 0
    %15 = vsyncpa [#allocation8], 0
    // Predicated region
    $region2: #{tpu_custom_call.1} parent=1 // pred_check
      _
    $region3: #{tpu_custom_call.1} parent=1 // pred_check_branch
      %17 = sbr.rel (0) target = $region5
    $region4: #{tpu_custom_call.1} parent=1 // pred_region
      %s19 = ssub.s32 128, 128
      %20 = vsyncadd [#allocation4], %s19
      %s22 = sshll.u32 [#allocation3], 4
      %s23 = int_to_ptr.vmem [resolvable:$true] %s22
      %25 = dma.hbm_to_vmem [thread:$0]  %s0, 128, %s23, [#allocation4]
    $region5: #{tpu_custom_call.1} parent=1 // pred_fallthru
      _
    // Predicated region
    $region6: #{tpu_custom_call.1} parent=1 // pred_check
      _
    $region7: #{tpu_custom_call.1} parent=1 // pred_check_branch
      %27 = sbr.rel (0) target = $region9
    $region8: #{tpu_custom_call.1} parent=1 // pred_region
      _
    $region9: #{tpu_custom_call.1} parent=1 // pred_fallthru
      _
    // Predicated region
    $region10: #{tpu_custom_call.1} parent=1 // pred_check
      _
    $region11: #{tpu_custom_call.1} parent=1 // pred_check_branch
      %29 = sbr.rel (0) target = $region13
    $region12: #{tpu_custom_call.1} parent=1 // pred_region
      _
    $region13: #{tpu_custom_call.1} parent=1 // pred_fallthru
      _
    // Predicated region
    $region14: #{tpu_custom_call.1} parent=1 // pred_check
      _
    $region15: #{tpu_custom_call.1} parent=1 // pred_check_branch
      %31 = sbr.rel (0) target = $region17
    $region16: #{tpu_custom_call.1} parent=1 // pred_region
      _
    $region17: #{tpu_custom_call.1} parent=1 // pred_fallthru
      _
    // Predicated region
    $region18: #{tpu_custom_call.1} parent=1 // pred_check
      _
    $region19: #{tpu_custom_call.1} parent=1 // pred_check_branch
      %33 = sbr.rel (0) target = $region21
    $region20: #{tpu_custom_call.1} parent=1 // pred_region
      _
    $region21: #{tpu_custom_call.1} parent=1 // pred_fallthru
      _
    // Predicated region
    $region22: #{tpu_custom_call.1} parent=1 // pred_check
      _
    $region23: #{tpu_custom_call.1} parent=1 // pred_check_branch
      %35 = sbr.rel (0) target = $region25
    $region24: #{tpu_custom_call.1} parent=1 // pred_region
      _
    $region25: #{tpu_custom_call.1} parent=1 // pred_fallthru
      _
    // Predicated region
    $region26: #{tpu_custom_call.1} parent=1 // pred_check
      _
    $region27: #{tpu_custom_call.1} parent=1 // pred_check_branch
      %37 = sbr.rel (0) target = $region29
    $region28: #{tpu_custom_call.1} parent=1 // pred_region
      %38 = dma.done [#allocation4], 128
    $region29: #{tpu_custom_call.1} parent=1 // pred_fallthru
      _
    %v39 = vld [vmem:[#allocation3] sm:$0xff]
    %v40 = vld [vmem:[%s1] sm:$0xff]
    %v41 = vld [vmem:[%s1 + $0x8] sm:$0xff]
    %v42 = vld [vmem:[%s3] sm:$0xff]
    %v43 = vld [vmem:[%s3 + $0x8] sm:$0xff]
    %45 = vset.pattern.permute.xlu0 0
    %46 = vperm.xlu0 %45, %v42
    %v47 = vpop.permute.xlu0 %46
    %50 = vset.pattern.permute.xlu0 0
    %51 = vperm.xlu0 %50, %v43
    %v52 = vpop.permute.xlu0 %51
    %vm54 = vcmask 261120
    %v56 = vsel %vm54, %v40, 0
    %v59 = vsel %vm54, %v41, 0
    %v62 = vsel %vm54, %v39, 0
    %64 = vmatprep.subr.mxu0 0.0
    %v65 = vand.u32 %v62, 4294901760
    %66 = vmatpush1.xpose.msra.mxu0 %v65
    %67 = vmatprep.subr.mxu0 0.0
    %68 = vmatpush1.xpose.msra.mxu0 0.0
    %69 = vmatprep.subr.mxu0 0.0
    %70 = vmatpush1.xpose.msra.mxu0 0.0
    %71 = vmatprep.subr.mxu0 0.0
    %72 = vmatpush1.xpose.msra.mxu0 0.0
    %73 = vmatprep.subr.mxu0 0.0
    %74 = vmatpush1.xpose.msra.mxu0 0.0
    %75 = vmatprep.subr.mxu0 0.0
    %76 = vmatpush1.xpose.msra.mxu0 0.0
    %77 = vmatprep.subr.mxu0 0.0
    %78 = vmatpush1.xpose.msra.mxu0 0.0
    %79 = vmatprep.subr.mxu0 0.0
    %80 = vmatpush1.xpose.msra.mxu0 0.0
    %81 = vmatprep.subr.mxu0 0.0
    %82 = vmatpush1.xpose.msra.mxu0 0.0
    %83 = vmatprep.subr.mxu0 0.0
    %84 = vmatpush1.xpose.msra.mxu0 0.0
    %85 = vmatprep.subr.mxu0 0.0
    %86 = vmatpush1.xpose.msra.mxu0 0.0
    %87 = vmatprep.subr.mxu0 0.0
    %88 = vmatpush1.xpose.msra.mxu0 0.0
    %89 = vmatprep.subr.mxu0 0.0
    %90 = vmatpush1.xpose.msra.mxu0 0.0
    %91 = vmatprep.subr.mxu0 0.0
    %92 = vmatpush1.xpose.msra.mxu0 0.0
    %93 = vmatprep.subr.mxu0 0.0
    %94 = vmatpush1.xpose.msra.mxu0 0.0
    %95 = vmatprep.subr.mxu0 0.0
    %96 = vmatpush1.xpose.msra.mxu0 0.0
    %97 = vmatprep.subr.mxu0 0.0
    %98 = vmatpush1.xpose.msra.mxu0 0.0
    %99 = vmatprep.subr.mxu0 0.0
    %100 = vmatpush1.xpose.msra.mxu0 0.0
    %101 = vmatprep.subr.mxu0 0.0
    %102 = vmatpush1.xpose.msra.mxu0 0.0
    %103 = vmatprep.subr.mxu0 0.0
    %104 = vmatpush1.xpose.msra.mxu0 0.0
    %105 = vmatprep.subr.mxu0 0.0
    %106 = vmatpush1.xpose.msra.mxu0 0.0
    %107 = vmatprep.subr.mxu0 0.0
    %108 = vmatpush1.xpose.msra.mxu0 0.0
    %109 = vmatprep.subr.mxu0 0.0
    %110 = vmatpush1.xpose.msra.mxu0 0.0
    %111 = vmatprep.subr.mxu0 0.0
    %112 = vmatpush1.xpose.msra.mxu0 0.0
    %113 = vmatprep.subr.mxu0 0.0
    %114 = vmatpush1.xpose.msra.mxu0 0.0
    %115 = vmatprep.subr.mxu0 0.0
    %116 = vmatpush1.xpose.msra.mxu0 0.0
    %117 = vmatprep.subr.mxu0 0.0
    %118 = vmatpush1.xpose.msra.mxu0 0.0
    %119 = vmatprep.subr.mxu0 0.0
    %120 = vmatpush1.xpose.msra.mxu0 0.0
    %121 = vmatprep.subr.mxu0 0.0
    %122 = vmatpush1.xpose.msra.mxu0 0.0
    %123 = vmatprep.subr.mxu0 0.0
    %124 = vmatpush1.xpose.msra.mxu0 0.0
    %125 = vmatprep.subr.mxu0 0.0
    %126 = vmatpush1.xpose.msra.mxu0 0.0
    %127 = vmatprep.subr.mxu0 0.0
    %128 = vmatpush1.xpose.msra.mxu0 0.0
    %129 = vmatprep.mubr.f32.mxu0 0.0
    %v130 = vand.u32 %v56, 4294901760
    %v131 = vsub.f32 %v56, %v130
    %v132 = vand.u32 %v131, 4294901760
    %v133 = vsub.f32 %v131, %v132
    %v134 = vand.u32 %v133, 4294901760
    %135 = vmatmul.mubr.f32.gmra.mrb[0].mxu0 %v134
    %v136 = vpop.f32.mrb[0].mxu0
    %v137 = vadd.f32 %v47, %v136
    %v138 = vpop.f32.mrb[0].mxu0
    %139 = vmatprep.mubr.f32.mxu0 0.0
    %v140 = vand.u32 %v59, 4294901760
    %v141 = vsub.f32 %v59, %v140
    %v142 = vand.u32 %v141, 4294901760
    %v143 = vsub.f32 %v141, %v142
    %v144 = vand.u32 %v143, 4294901760
    %145 = vmatmul.mubr.f32.gmra.mrb[0].mxu0 %v144
    %v146 = vpop.f32.mrb[0].mxu0
    %v147 = vadd.f32 %v52, %v146
    %v148 = vpop.f32.mrb[0].mxu0
    %149 = vdwg.mxu0
    %150 = vmatprep.subr.mxu0 0.0
    %v151 = vand.u32 %v62, 4294901760
    %v152 = vsub.f32 %v62, %v151
    %v153 = vand.u32 %v152, 4294901760
    %v154 = vsub.f32 %v152, %v153
    %v155 = vand.u32 %v154, 4294901760
    %156 = vmatpush1.xpose.msra.mxu0 %v155
    %157 = vmatprep.subr.mxu0 0.0
    %158 = vmatpush1.xpose.msra.mxu0 0.0
    %159 = vmatprep.subr.mxu0 0.0
    %160 = vmatpush1.xpose.msra.mxu0 0.0
    %161 = vmatprep.subr.mxu0 0.0
    %162 = vmatpush1.xpose.msra.mxu0 0.0
    %163 = vmatprep.subr.mxu0 0.0
    %164 = vmatpush1.xpose.msra.mxu0 0.0
    %165 = vmatprep.subr.mxu0 0.0
    %166 = vmatpush1.xpose.msra.mxu0 0.0
    %167 = vmatprep.subr.mxu0 0.0
    %168 = vmatpush1.xpose.msra.mxu0 0.0
    %169 = vmatprep.subr.mxu0 0.0
    %170 = vmatpush1.xpose.msra.mxu0 0.0
    %171 = vmatprep.subr.mxu0 0.0
    %172 = vmatpush1.xpose.msra.mxu0 0.0
    %173 = vmatprep.subr.mxu0 0.0
    %174 = vmatpush1.xpose.msra.mxu0 0.0
    %175 = vmatprep.subr.mxu0 0.0
    %176 = vmatpush1.xpose.msra.mxu0 0.0
    %177 = vmatprep.subr.mxu0 0.0
    %178 = vmatpush1.xpose.msra.mxu0 0.0
    %179 = vmatprep.subr.mxu0 0.0
    %180 = vmatpush1.xpose.msra.mxu0 0.0
    %181 = vmatprep.subr.mxu0 0.0
    %182 = vmatpush1.xpose.msra.mxu0 0.0
    %183 = vmatprep.subr.mxu0 0.0
    %184 = vmatpush1.xpose.msra.mxu0 0.0
    %185 = vmatprep.subr.mxu0 0.0
    %186 = vmatpush1.xpose.msra.mxu0 0.0
    %187 = vmatprep.subr.mxu0 0.0
    %188 = vmatpush1.xpose.msra.mxu0 0.0
    %189 = vmatprep.subr.mxu0 0.0
    %190 = vmatpush1.xpose.msra.mxu0 0.0
    %191 = vmatprep.subr.mxu0 0.0
    %192 = vmatpush1.xpose.msra.mxu0 0.0
    %193 = vmatprep.subr.mxu0 0.0
    %194 = vmatpush1.xpose.msra.mxu0 0.0
    %195 = vmatprep.subr.mxu0 0.0
    %196 = vmatpush1.xpose.msra.mxu0 0.0
    %197 = vmatprep.subr.mxu0 0.0
    %198 = vmatpush1.xpose.msra.mxu0 0.0
    %199 = vmatprep.subr.mxu0 0.0
    %200 = vmatpush1.xpose.msra.mxu0 0.0
    %201 = vmatprep.subr.mxu0 0.0
    %202 = vmatpush1.xpose.msra.mxu0 0.0
    %203 = vmatprep.subr.mxu0 0.0
    %204 = vmatpush1.xpose.msra.mxu0 0.0
    %205 = vmatprep.subr.mxu0 0.0
    %206 = vmatpush1.xpose.msra.mxu0 0.0
    %207 = vmatprep.subr.mxu0 0.0
    %208 = vmatpush1.xpose.msra.mxu0 0.0
    %209 = vmatprep.subr.mxu0 0.0
    %210 = vmatpush1.xpose.msra.mxu0 0.0
    %211 = vmatprep.subr.mxu0 0.0
    %212 = vmatpush1.xpose.msra.mxu0 0.0
    %213 = vmatprep.subr.mxu0 0.0
    %214 = vmatpush1.xpose.msra.mxu0 0.0
    %215 = vmatprep.subr.mxu0 0.0
    %216 = vmatpush1.xpose.msra.mxu0 0.0
    %217 = vmatprep.subr.mxu0 0.0
    %218 = vmatpush1.xpose.msra.mxu0 0.0
    %219 = vmatprep.mubr.f32.mxu0 0.0
    %v220 = vand.u32 %v56, 4294901760
    %221 = vmatmul.mubr.f32.gmra.mrb[0].mxu0 %v220
    %v222 = vpop.f32.mrb[0].mxu0
    %v223 = vadd.f32 %v137, %v222
    %v224 = vpop.f32.mrb[0].mxu0
    %225 = vmatprep.mubr.f32.mxu0 0.0
    %v226 = vand.u32 %v59, 4294901760
    %227 = vmatmul.mubr.f32.gmra.mrb[0].mxu0 %v226
    %v228 = vpop.f32.mrb[0].mxu0
    %v229 = vadd.f32 %v147, %v228
    %v230 = vpop.f32.mrb[0].mxu0
    %231 = vdwg.mxu0
    %232 = vmatprep.subr.mxu0 0.0
    %v233 = vand.u32 %v62, 4294901760
    %v234 = vsub.f32 %v62, %v233
    %235 = vmatpush1.xpose.msra.mxu0 %v234
    %236 = vmatprep.subr.mxu0 0.0
    %237 = vmatpush1.xpose.msra.mxu0 0.0
    %238 = vmatprep.subr.mxu0 0.0
    %239 = vmatpush1.xpose.msra.mxu0 0.0
    %240 = vmatprep.subr.mxu0 0.0
    %241 = vmatpush1.xpose.msra.mxu0 0.0
    %242 = vmatprep.subr.mxu0 0.0
    %243 = vmatpush1.xpose.msra.mxu0 0.0
    %244 = vmatprep.subr.mxu0 0.0
    %245 = vmatpush1.xpose.msra.mxu0 0.0
    %246 = vmatprep.subr.mxu0 0.0
    %247 = vmatpush1.xpose.msra.mxu0 0.0
    %248 = vmatprep.subr.mxu0 0.0
    %249 = vmatpush1.xpose.msra.mxu0 0.0
    %250 = vmatprep.subr.mxu0 0.0
    %251 = vmatpush1.xpose.msra.mxu0 0.0
    %252 = vmatprep.subr.mxu0 0.0
    %253 = vmatpush1.xpose.msra.mxu0 0.0
    %254 = vmatprep.subr.mxu0 0.0
    %255 = vmatpush1.xpose.msra.mxu0 0.0
    %256 = vmatprep.subr.mxu0 0.0
    %257 = vmatpush1.xpose.msra.mxu0 0.0
    %258 = vmatprep.subr.mxu0 0.0
    %259 = vmatpush1.xpose.msra.mxu0 0.0
    %260 = vmatprep.subr.mxu0 0.0
    %261 = vmatpush1.xpose.msra.mxu0 0.0
    %262 = vmatprep.subr.mxu0 0.0
    %263 = vmatpush1.xpose.msra.mxu0 0.0
    %264 = vmatprep.subr.mxu0 0.0
    %265 = vmatpush1.xpose.msra.mxu0 0.0
    %266 = vmatprep.subr.mxu0 0.0
    %267 = vmatpush1.xpose.msra.mxu0 0.0
    %268 = vmatprep.subr.mxu0 0.0
    %269 = vmatpush1.xpose.msra.mxu0 0.0
    %270 = vmatprep.subr.mxu0 0.0
    %271 = vmatpush1.xpose.msra.mxu0 0.0
    %272 = vmatprep.subr.mxu0 0.0
    %273 = vmatpush1.xpose.msra.mxu0 0.0
    %274 = vmatprep.subr.mxu0 0.0
    %275 = vmatpush1.xpose.msra.mxu0 0.0
    %276 = vmatprep.subr.mxu0 0.0
    %277 = vmatpush1.xpose.msra.mxu0 0.0
    %278 = vmatprep.subr.mxu0 0.0
    %279 = vmatpush1.xpose.msra.mxu0 0.0
    %280 = vmatprep.subr.mxu0 0.0
    %281 = vmatpush1.xpose.msra.mxu0 0.0
    %282 = vmatprep.subr.mxu0 0.0
    %283 = vmatpush1.xpose.msra.mxu0 0.0
    %284 = vmatprep.subr.mxu0 0.0
    %285 = vmatpush1.xpose.msra.mxu0 0.0
    %286 = vmatprep.subr.mxu0 0.0
    %287 = vmatpush1.xpose.msra.mxu0 0.0
    %288 = vmatprep.subr.mxu0 0.0
    %289 = vmatpush1.xpose.msra.mxu0 0.0
    %290 = vmatprep.subr.mxu0 0.0
    %291 = vmatpush1.xpose.msra.mxu0 0.0
    %292 = vmatprep.subr.mxu0 0.0
    %293 = vmatpush1.xpose.msra.mxu0 0.0
    %294 = vmatprep.subr.mxu0 0.0
    %295 = vmatpush1.xpose.msra.mxu0 0.0
    %296 = vmatprep.subr.mxu0 0.0
    %297 = vmatpush1.xpose.msra.mxu0 0.0
    %298 = vmatprep.mubr.f32.mxu0 0.0
    %v299 = vand.u32 %v56, 4294901760
    %v300 = vsub.f32 %v56, %v299
    %301 = vmatmul.mubr.f32.gmra.mrb[0].mxu0 %v300
    %v302 = vpop.f32.mrb[0].mxu0
    %v303 = vadd.f32 %v223, %v302
    %v304 = vpop.f32.mrb[0].mxu0
    %305 = vmatprep.mubr.f32.mxu0 0.0
    %v306 = vand.u32 %v59, 4294901760
    %v307 = vsub.f32 %v59, %v306
    %308 = vmatmul.mubr.f32.gmra.mrb[0].mxu0 %v307
    %v309 = vpop.f32.mrb[0].mxu0
    %v310 = vadd.f32 %v229, %v309
    %v311 = vpop.f32.mrb[0].mxu0
    %312 = vdwg.mxu0
    %313 = vmatprep.subr.mxu0 0.0
    %v314 = vand.u32 %v62, 4294901760
    %315 = vmatpush1.xpose.msra.mxu0 %v314
    %316 = vmatprep.subr.mxu0 0.0
    %317 = vmatpush1.xpose.msra.mxu0 0.0
    %318 = vmatprep.subr.mxu0 0.0
    %319 = vmatpush1.xpose.msra.mxu0 0.0
    %320 = vmatprep.subr.mxu0 0.0
    %321 = vmatpush1.xpose.msra.mxu0 0.0
    %322 = vmatprep.subr.mxu0 0.0
    %323 = vmatpush1.xpose.msra.mxu0 0.0
    %324 = vmatprep.subr.mxu0 0.0
    %325 = vmatpush1.xpose.msra.mxu0 0.0
    %326 = vmatprep.subr.mxu0 0.0
    %327 = vmatpush1.xpose.msra.mxu0 0.0
    %328 = vmatprep.subr.mxu0 0.0
    %329 = vmatpush1.xpose.msra.mxu0 0.0
    %330 = vmatprep.subr.mxu0 0.0
    %331 = vmatpush1.xpose.msra.mxu0 0.0
    %332 = vmatprep.subr.mxu0 0.0
    %333 = vmatpush1.xpose.msra.mxu0 0.0
    %334 = vmatprep.subr.mxu0 0.0
    %335 = vmatpush1.xpose.msra.mxu0 0.0
    %336 = vmatprep.subr.mxu0 0.0
    %337 = vmatpush1.xpose.msra.mxu0 0.0
    %338 = vmatprep.subr.mxu0 0.0
    %339 = vmatpush1.xpose.msra.mxu0 0.0
    %340 = vmatprep.subr.mxu0 0.0
    %341 = vmatpush1.xpose.msra.mxu0 0.0
    %342 = vmatprep.subr.mxu0 0.0
    %343 = vmatpush1.xpose.msra.mxu0 0.0
    %344 = vmatprep.subr.mxu0 0.0
    %345 = vmatpush1.xpose.msra.mxu0 0.0
    %346 = vmatprep.subr.mxu0 0.0
    %347 = vmatpush1.xpose.msra.mxu0 0.0
    %348 = vmatprep.subr.mxu0 0.0
    %349 = vmatpush1.xpose.msra.mxu0 0.0
    %350 = vmatprep.subr.mxu0 0.0
    %351 = vmatpush1.xpose.msra.mxu0 0.0
    %352 = vmatprep.subr.mxu0 0.0
    %353 = vmatpush1.xpose.msra.mxu0 0.0
    %354 = vmatprep.subr.mxu0 0.0
    %355 = vmatpush1.xpose.msra.mxu0 0.0
    %356 = vmatprep.subr.mxu0 0.0
    %357 = vmatpush1.xpose.msra.mxu0 0.0
    %358 = vmatprep.subr.mxu0 0.0
    %359 = vmatpush1.xpose.msra.mxu0 0.0
    %360 = vmatprep.subr.mxu0 0.0
    %361 = vmatpush1.xpose.msra.mxu0 0.0
    %362 = vmatprep.subr.mxu0 0.0
    %363 = vmatpush1.xpose.msra.mxu0 0.0
    %364 = vmatprep.subr.mxu0 0.0
    %365 = vmatpush1.xpose.msra.mxu0 0.0
    %366 = vmatprep.subr.mxu0 0.0
    %367 = vmatpush1.xpose.msra.mxu0 0.0
    %368 = vmatprep.subr.mxu0 0.0
    %369 = vmatpush1.xpose.msra.mxu0 0.0
    %370 = vmatprep.subr.mxu0 0.0
    %371 = vmatpush1.xpose.msra.mxu0 0.0
    %372 = vmatprep.subr.mxu0 0.0
    %373 = vmatpush1.xpose.msra.mxu0 0.0
    %374 = vmatprep.subr.mxu0 0.0
    %375 = vmatpush1.xpose.msra.mxu0 0.0
    %376 = vmatprep.subr.mxu0 0.0
    %377 = vmatpush1.xpose.msra.mxu0 0.0
    %378 = vmatprep.mubr.f32.mxu0 0.0
    %v379 = vand.u32 %v56, 4294901760
    %v380 = vsub.f32 %v56, %v379
    %v381 = vand.u32 %v380, 4294901760
    %382 = vmatmul.mubr.f32.gmra.mrb[0].mxu0 %v381
    %v383 = vpop.f32.mrb[0].mxu0
    %v384 = vadd.f32 %v303, %v383
    %v385 = vpop.f32.mrb[0].mxu0
    %386 = vmatprep.mubr.f32.mxu0 0.0
    %v387 = vand.u32 %v59, 4294901760
    %v388 = vsub.f32 %v59, %v387
    %v389 = vand.u32 %v388, 4294901760
    %390 = vmatmul.mubr.f32.gmra.mrb[0].mxu0 %v389
    %v391 = vpop.f32.mrb[0].mxu0
    %v392 = vadd.f32 %v310, %v391
    %v393 = vpop.f32.mrb[0].mxu0
    %394 = vdwg.mxu0
    %395 = vmatprep.subr.mxu0 0.0
    %v396 = vand.u32 %v62, 4294901760
    %v397 = vsub.f32 %v62, %v396
    %v398 = vand.u32 %v397, 4294901760
    %399 = vmatpush1.xpose.msra.mxu0 %v398
    %400 = vmatprep.subr.mxu0 0.0
    %401 = vmatpush1.xpose.msra.mxu0 0.0
    %402 = vmatprep.subr.mxu0 0.0
    %403 = vmatpush1.xpose.msra.mxu0 0.0
    %404 = vmatprep.subr.mxu0 0.0
    %405 = vmatpush1.xpose.msra.mxu0 0.0
    %406 = vmatprep.subr.mxu0 0.0
    %407 = vmatpush1.xpose.msra.mxu0 0.0
    %408 = vmatprep.subr.mxu0 0.0
    %409 = vmatpush1.xpose.msra.mxu0 0.0
    %410 = vmatprep.subr.mxu0 0.0
    %411 = vmatpush1.xpose.msra.mxu0 0.0
    %412 = vmatprep.subr.mxu0 0.0
    %413 = vmatpush1.xpose.msra.mxu0 0.0
    %414 = vmatprep.subr.mxu0 0.0
    %415 = vmatpush1.xpose.msra.mxu0 0.0
    %416 = vmatprep.subr.mxu0 0.0
    %417 = vmatpush1.xpose.msra.mxu0 0.0
    %418 = vmatprep.subr.mxu0 0.0
    %419 = vmatpush1.xpose.msra.mxu0 0.0
    %420 = vmatprep.subr.mxu0 0.0
    %421 = vmatpush1.xpose.msra.mxu0 0.0
    %422 = vmatprep.subr.mxu0 0.0
    %423 = vmatpush1.xpose.msra.mxu0 0.0
    %424 = vmatprep.subr.mxu0 0.0
    %425 = vmatpush1.xpose.msra.mxu0 0.0
    %426 = vmatprep.subr.mxu0 0.0
    %427 = vmatpush1.xpose.msra.mxu0 0.0
    %428 = vmatprep.subr.mxu0 0.0
    %429 = vmatpush1.xpose.msra.mxu0 0.0
    %430 = vmatprep.subr.mxu0 0.0
    %431 = vmatpush1.xpose.msra.mxu0 0.0
    %432 = vmatprep.subr.mxu0 0.0
    %433 = vmatpush1.xpose.msra.mxu0 0.0
    %434 = vmatprep.subr.mxu0 0.0
    %435 = vmatpush1.xpose.msra.mxu0 0.0
    %436 = vmatprep.subr.mxu0 0.0
    %437 = vmatpush1.xpose.msra.mxu0 0.0
    %438 = vmatprep.subr.mxu0 0.0
    %439 = vmatpush1.xpose.msra.mxu0 0.0
    %440 = vmatprep.subr.mxu0 0.0
    %441 = vmatpush1.xpose.msra.mxu0 0.0
    %442 = vmatprep.subr.mxu0 0.0
    %443 = vmatpush1.xpose.msra.mxu0 0.0
    %444 = vmatprep.subr.mxu0 0.0
    %445 = vmatpush1.xpose.msra.mxu0 0.0
    %446 = vmatprep.subr.mxu0 0.0
    %447 = vmatpush1.xpose.msra.mxu0 0.0
    %448 = vmatprep.subr.mxu0 0.0
    %449 = vmatpush1.xpose.msra.mxu0 0.0
    %450 = vmatprep.subr.mxu0 0.0
    %451 = vmatpush1.xpose.msra.mxu0 0.0
    %452 = vmatprep.subr.mxu0 0.0
    %453 = vmatpush1.xpose.msra.mxu0 0.0
    %454 = vmatprep.subr.mxu0 0.0
    %455 = vmatpush1.xpose.msra.mxu0 0.0
    %456 = vmatprep.subr.mxu0 0.0
    %457 = vmatpush1.xpose.msra.mxu0 0.0
    %458 = vmatprep.subr.mxu0 0.0
    %459 = vmatpush1.xpose.msra.mxu0 0.0
    %460 = vmatprep.subr.mxu0 0.0
    %461 = vmatpush1.xpose.msra.mxu0 0.0
    %462 = vmatprep.mubr.f32.mxu0 0.0
    %v463 = vand.u32 %v56, 4294901760
    %464 = vmatmul.mubr.f32.gmra.mrb[0].mxu0 %v463
    %v465 = vpop.f32.mrb[0].mxu0
    %v466 = vadd.f32 %v384, %v465
    %v467 = vpop.f32.mrb[0].mxu0
    %468 = vmatprep.mubr.f32.mxu0 0.0
    %v469 = vand.u32 %v59, 4294901760
    %470 = vmatmul.mubr.f32.gmra.mrb[0].mxu0 %v469
    %v471 = vpop.f32.mrb[0].mxu0
    %v472 = vadd.f32 %v392, %v471
    %v473 = vpop.f32.mrb[0].mxu0
    %474 = vdwg.mxu0
    %475 = vmatprep.subr.mxu0 0.0
    %v476 = vand.u32 %v62, 4294901760
    %477 = vmatpush1.xpose.msra.mxu0 %v476
    %478 = vmatprep.subr.mxu0 0.0
    %479 = vmatpush1.xpose.msra.mxu0 0.0
    %480 = vmatprep.subr.mxu0 0.0
    %481 = vmatpush1.xpose.msra.mxu0 0.0
    %482 = vmatprep.subr.mxu0 0.0
    %483 = vmatpush1.xpose.msra.mxu0 0.0
    %484 = vmatprep.subr.mxu0 0.0
    %485 = vmatpush1.xpose.msra.mxu0 0.0
    %486 = vmatprep.subr.mxu0 0.0
    %487 = vmatpush1.xpose.msra.mxu0 0.0
    %488 = vmatprep.subr.mxu0 0.0
    %489 = vmatpush1.xpose.msra.mxu0 0.0
    %490 = vmatprep.subr.mxu0 0.0
    %491 = vmatpush1.xpose.msra.mxu0 0.0
    %492 = vmatprep.subr.mxu0 0.0
    %493 = vmatpush1.xpose.msra.mxu0 0.0
    %494 = vmatprep.subr.mxu0 0.0
    %495 = vmatpush1.xpose.msra.mxu0 0.0
    %496 = vmatprep.subr.mxu0 0.0
    %497 = vmatpush1.xpose.msra.mxu0 0.0
    %498 = vmatprep.subr.mxu0 0.0
    %499 = vmatpush1.xpose.msra.mxu0 0.0
    %500 = vmatprep.subr.mxu0 0.0
    %501 = vmatpush1.xpose.msra.mxu0 0.0
    %502 = vmatprep.subr.mxu0 0.0
    %503 = vmatpush1.xpose.msra.mxu0 0.0
    %504 = vmatprep.subr.mxu0 0.0
    %505 = vmatpush1.xpose.msra.mxu0 0.0
    %506 = vmatprep.subr.mxu0 0.0
    %507 = vmatpush1.xpose.msra.mxu0 0.0
    %508 = vmatprep.subr.mxu0 0.0
    %509 = vmatpush1.xpose.msra.mxu0 0.0
    %510 = vmatprep.subr.mxu0 0.0
    %511 = vmatpush1.xpose.msra.mxu0 0.0
    %512 = vmatprep.subr.mxu0 0.0
    %513 = vmatpush1.xpose.msra.mxu0 0.0
    %514 = vmatprep.subr.mxu0 0.0
    %515 = vmatpush1.xpose.msra.mxu0 0.0
    %516 = vmatprep.subr.mxu0 0.0
    %517 = vmatpush1.xpose.msra.mxu0 0.0
    %518 = vmatprep.subr.mxu0 0.0
    %519 = vmatpush1.xpose.msra.mxu0 0.0
    %520 = vmatprep.subr.mxu0 0.0
    %521 = vmatpush1.xpose.msra.mxu0 0.0
    %522 = vmatprep.subr.mxu0 0.0
    %523 = vmatpush1.xpose.msra.mxu0 0.0
    %524 = vmatprep.subr.mxu0 0.0
    %525 = vmatpush1.xpose.msra.mxu0 0.0
    %526 = vmatprep.subr.mxu0 0.0
    %527 = vmatpush1.xpose.msra.mxu0 0.0
    %528 = vmatprep.subr.mxu0 0.0
    %529 = vmatpush1.xpose.msra.mxu0 0.0
    %530 = vmatprep.subr.mxu0 0.0
    %531 = vmatpush1.xpose.msra.mxu0 0.0
    %532 = vmatprep.subr.mxu0 0.0
    %533 = vmatpush1.xpose.msra.mxu0 0.0
    %534 = vmatprep.subr.mxu0 0.0
    %535 = vmatpush1.xpose.msra.mxu0 0.0
    %536 = vmatprep.subr.mxu0 0.0
    %537 = vmatpush1.xpose.msra.mxu0 0.0
    %538 = vmatprep.subr.mxu0 0.0
    %539 = vmatpush1.xpose.msra.mxu0 0.0
    %540 = vmatprep.mubr.f32.mxu0 0.0
    %v541 = vand.u32 %v56, 4294901760
    %542 = vmatmul.mubr.f32.gmra.mrb[0].mxu0 %v541
    %v543 = vpop.f32.mrb[0].mxu0
    %v544 = vadd.f32 %v466, %v543
    %v545 = vpop.f32.mrb[0].mxu0
    %546 = vmatprep.mubr.f32.mxu0 0.0
    %v547 = vand.u32 %v59, 4294901760
    %548 = vmatmul.mubr.f32.gmra.mrb[0].mxu0 %v547
    %v549 = vpop.f32.mrb[0].mxu0
    %v550 = vadd.f32 %v472, %v549
    %v551 = vpop.f32.mrb[0].mxu0
    %552 = vdwg.mxu0
    %v553 = vld [vmem:[%s5] sm:$0xff]
    %v554 = vld [vmem:[%s5 + $0x8] sm:$0xff]
    %v555 = vtanh.pop %v544
    %vm556 = vcmask 57344
    %557 = vst.msk [vmem:[#allocation2] sm:$0x1] %vm556, %v555
    %559 = vset.pattern.permute.xlu0 0
    %560 = vperm.xlu0 %559, %v553
    %v561 = vpop.permute.xlu0 %560
    %564 = vset.pattern.permute.xlu0 0
    %565 = vperm.xlu0 %564, %v554
    %v566 = vpop.permute.xlu0 %565
    %v568 = vlaneseq
    %v569 = vshrl.u32 %v568, 7
    %v570 = vsub.s32 0, %v569
    %v571 = vrot.slane %v555, %v570
    %v572 = vmul.f32 %v561, %v571
    %v573 = vmul.f32 %v566, %v571
    %v574 = vadd.f32 %v544, %v572
    %v575 = vadd.f32 %v550, %v573
    %v576 = vtanh.pop %v574
    %vm577 = vcmask 58369
    %578 = vst.msk [vmem:[#allocation2] sm:$0x2] %vm577, %v576
    %579 = vset.pattern.permute.xlu0 1
    %580 = vperm.xlu0 %579, %v553
    %v581 = vpop.permute.xlu0 %580
    %583 = vset.pattern.permute.xlu0 1
    %584 = vperm.xlu0 %583, %v554
    %v585 = vpop.permute.xlu0 %584
    %v587 = vlaneseq
    %v588 = vshrl.u32 %v587, 7
    %v589 = vsub.s32 1, %v588
    %v590 = vrot.slane %v576, %v589
    %v591 = vmul.f32 %v581, %v590
    %v592 = vmul.f32 %v585, %v590
    %v593 = vadd.f32 %v574, %v591
    %v594 = vadd.f32 %v575, %v592
    %v595 = vtanh.pop %v593
    %vm596 = vcmask 59394
    %597 = vst.msk [vmem:[#allocation2] sm:$0x4] %vm596, %v595
    %598 = vset.pattern.permute.xlu0 2
    %599 = vperm.xlu0 %598, %v553
    %v600 = vpop.permute.xlu0 %599
    %602 = vset.pattern.permute.xlu0 2
    %603 = vperm.xlu0 %602, %v554
    %v604 = vpop.permute.xlu0 %603
    %v606 = vlaneseq
    %v607 = vshrl.u32 %v606, 7
    %v608 = vsub.s32 2, %v607
    %v609 = vrot.slane %v595, %v608
    %v610 = vmul.f32 %v600, %v609
    %v611 = vmul.f32 %v604, %v609
    %v612 = vadd.f32 %v593, %v610
    %v613 = vadd.f32 %v594, %v611
    %v614 = vtanh.pop %v612
    %vm615 = vcmask 60419
    %616 = vst.msk [vmem:[#allocation2] sm:$0x8] %vm615, %v614
    %617 = vset.pattern.permute.xlu0 3
    %618 = vperm.xlu0 %617, %v553
    %v619 = vpop.permute.xlu0 %618
    %621 = vset.pattern.permute.xlu0 3
    %622 = vperm.xlu0 %621, %v554
    %v623 = vpop.permute.xlu0 %622
    %v625 = vlaneseq
    %v626 = vshrl.u32 %v625, 7
    %v627 = vsub.s32 3, %v626
    %v628 = vrot.slane %v614, %v627
    %v629 = vmul.f32 %v619, %v628
    %v630 = vmul.f32 %v623, %v628
    %v631 = vadd.f32 %v612, %v629
    %v632 = vadd.f32 %v613, %v630
    %v633 = vtanh.pop %v631
    %vm634 = vcmask 61444
    %635 = vst.msk [vmem:[#allocation2] sm:$0x10] %vm634, %v633
    %636 = vset.pattern.permute.xlu0 4
    %637 = vperm.xlu0 %636, %v553
    %v638 = vpop.permute.xlu0 %637
    %640 = vset.pattern.permute.xlu0 4
    %641 = vperm.xlu0 %640, %v554
    %v642 = vpop.permute.xlu0 %641
    %v644 = vlaneseq
    %v645 = vshrl.u32 %v644, 7
    %v646 = vsub.s32 4, %v645
    %v647 = vrot.slane %v633, %v646
    %v648 = vmul.f32 %v638, %v647
    %v649 = vmul.f32 %v642, %v647
    %v650 = vadd.f32 %v631, %v648
    %v651 = vadd.f32 %v632, %v649
    %v652 = vtanh.pop %v650
    %vm653 = vcmask 62469
    %654 = vst.msk [vmem:[#allocation2] sm:$0x20] %vm653, %v652
    %655 = vset.pattern.permute.xlu0 5
    %656 = vperm.xlu0 %655, %v553
    %v657 = vpop.permute.xlu0 %656
    %659 = vset.pattern.permute.xlu0 5
    %660 = vperm.xlu0 %659, %v554
    %v661 = vpop.permute.xlu0 %660
    %v663 = vlaneseq
    %v664 = vshrl.u32 %v663, 7
    %v665 = vsub.s32 5, %v664
    %v666 = vrot.slane %v652, %v665
    %v667 = vmul.f32 %v657, %v666
    %v668 = vmul.f32 %v661, %v666
    %v669 = vadd.f32 %v650, %v667
    %v670 = vadd.f32 %v651, %v668
    %v671 = vtanh.pop %v669
    %vm672 = vcmask 63494
    %673 = vst.msk [vmem:[#allocation2] sm:$0x40] %vm672, %v671
    %674 = vset.pattern.permute.xlu0 6
    %675 = vperm.xlu0 %674, %v553
    %v676 = vpop.permute.xlu0 %675
    %678 = vset.pattern.permute.xlu0 6
    %679 = vperm.xlu0 %678, %v554
    %v680 = vpop.permute.xlu0 %679
    %v682 = vlaneseq
    %v683 = vshrl.u32 %v682, 7
    %v684 = vsub.s32 6, %v683
    %v685 = vrot.slane %v671, %v684
    %v686 = vmul.f32 %v676, %v685
    %v687 = vmul.f32 %v680, %v685
    %v688 = vadd.f32 %v669, %v686
    %v689 = vadd.f32 %v670, %v687
    %v690 = vtanh.pop %v688
    %vm691 = vcmask 64519
    %692 = vst.msk [vmem:[#allocation2] sm:$0x80] %vm691, %v690
    %693 = vset.pattern.permute.xlu0 7
    %694 = vperm.xlu0 %693, %v554
    %v695 = vpop.permute.xlu0 %694
    %v697 = vlaneseq
    %v698 = vshrl.u32 %v697, 7
    %v699 = vsub.s32 7, %v698
    %v700 = vrot.slane %v690, %v699
    %v701 = vmul.f32 %v695, %v700
    %v702 = vadd.f32 %v689, %v701
    %v703 = vtanh.pop %v702
    %704 = vst.msk [vmem:[#allocation2 + $0x8] sm:$0x1] %vm556, %v703
    %705 = vset.pattern.permute.xlu0 8
    %706 = vperm.xlu0 %705, %v554
    %v707 = vpop.permute.xlu0 %706
    %v709 = vlaneseq
    %v710 = vshrl.u32 %v709, 7
    %v711 = vsub.s32 0, %v710
    %v712 = vrot.slane %v703, %v711
    %v713 = vmul.f32 %v707, %v712
    %v714 = vadd.f32 %v702, %v713
    %v715 = vtanh.pop %v714
    %716 = vst.msk [vmem:[#allocation2 + $0x8] sm:$0x2] %vm577, %v715
    %717 = vset.pattern.permute.xlu0 9
    %718 = vperm.xlu0 %717, %v554
    %v719 = vpop.permute.xlu0 %718
    %v721 = vlaneseq
    %v722 = vshrl.u32 %v721, 7
    %v723 = vsub.s32 1, %v722
    %v724 = vrot.slane %v715, %v723
    %v725 = vmul.f32 %v719, %v724
    %v726 = vadd.f32 %v714, %v725
    %v727 = vtanh.pop %v726
    %728 = vst.msk [vmem:[#allocation2 + $0x8] sm:$0x4] %vm596, %v727
    %729 = vset.pattern.permute.xlu0 10
    %730 = vperm.xlu0 %729, %v554
    %v731 = vpop.permute.xlu0 %730
    %v733 = vlaneseq
    %v734 = vshrl.u32 %v733, 7
    %v735 = vsub.s32 2, %v734
    %v736 = vrot.slane %v727, %v735
    %v737 = vmul.f32 %v731, %v736
    %v738 = vadd.f32 %v726, %v737
    %v739 = vtanh.pop %v738
    %740 = vst.msk [vmem:[#allocation2 + $0x8] sm:$0x8] %vm615, %v739
    %741 = vset.pattern.permute.xlu0 11
    %742 = vperm.xlu0 %741, %v554
    %v743 = vpop.permute.xlu0 %742
    %v745 = vlaneseq
    %v746 = vshrl.u32 %v745, 7
    %v747 = vsub.s32 3, %v746
    %v748 = vrot.slane %v739, %v747
    %v749 = vmul.f32 %v743, %v748
    %v750 = vadd.f32 %v738, %v749
    %v751 = vtanh.pop %v750
    %752 = vst.msk [vmem:[#allocation2 + $0x8] sm:$0x10] %vm634, %v751
    %753 = vset.pattern.permute.xlu0 12
    %754 = vperm.xlu0 %753, %v554
    %v755 = vpop.permute.xlu0 %754
    %v757 = vlaneseq
    %v758 = vshrl.u32 %v757, 7
    %v759 = vsub.s32 4, %v758
    %v760 = vrot.slane %v751, %v759
    %v761 = vmul.f32 %v755, %v760
    %v762 = vadd.f32 %v750, %v761
    %v763 = vtanh.pop %v762
    %764 = vst.msk [vmem:[#allocation2 + $0x8] sm:$0x20] %vm653, %v763
    %765 = vset.pattern.permute.xlu0 13
    %766 = vperm.xlu0 %765, %v554
    %v767 = vpop.permute.xlu0 %766
    %v769 = vlaneseq
    %v770 = vshrl.u32 %v769, 7
    %v771 = vsub.s32 5, %v770
    %v772 = vrot.slane %v763, %v771
    %v773 = vmul.f32 %v767, %v772
    %v774 = vadd.f32 %v762, %v773
    %v775 = vtanh.pop %v774
    %776 = vst.msk [vmem:[#allocation2 + $0x8] sm:$0x40] %vm672, %v775
    %777 = vset.pattern.permute.xlu0 14
    %778 = vperm.xlu0 %777, %v554
    %v779 = vpop.permute.xlu0 %778
    %v781 = vlaneseq
    %v782 = vshrl.u32 %v781, 7
    %v783 = vsub.s32 6, %v782
    %v784 = vrot.slane %v775, %v783
    %v785 = vmul.f32 %v779, %v784
    %v786 = vadd.f32 %v774, %v785
    %v787 = vtanh.pop %v786
    %788 = vst.msk [vmem:[#allocation2 + $0x8] sm:$0x80] %vm691, %v787
    %v789 = vld [vmem:[#allocation2] sm:$0xff]
    %v790 = vld [vmem:[#allocation2 + $0x8] sm:$0xff]
    %v791 = vld [vmem:[%s2] sm:$0xff]
    %v792 = vld [vmem:[%s2 + $0x8] sm:$0xff]
    %793 = vxpose.xlu0.b32.start [1/16] %v789, 128
    %794 = vxpose.xlu0.b32.cont [2/16] %v790, 128
    %795 = vxpose.xlu0.b32.cont [3/16] 0.0, 128
    %796 = vxpose.xlu0.b32.cont [4/16] 0.0, 128
    %797 = vxpose.xlu0.b32.cont [5/16] 0.0, 128
    %798 = vxpose.xlu0.b32.cont [6/16] 0.0, 128
    %799 = vxpose.xlu0.b32.cont [7/16] 0.0, 128
    %800 = vxpose.xlu0.b32.cont [8/16] 0.0, 128
    %801 = vxpose.xlu0.b32.cont [9/16] 0.0, 128
    %802 = vxpose.xlu0.b32.cont [10/16] 0.0, 128
    %803 = vxpose.xlu0.b32.cont [11/16] 0.0, 128
    %804 = vxpose.xlu0.b32.cont [12/16] 0.0, 128
    %805 = vxpose.xlu0.b32.cont [13/16] 0.0, 128
    %806 = vxpose.xlu0.b32.cont [14/16] 0.0, 128
    %807 = vxpose.xlu0.b32.cont [15/16] 0.0, 128
    %808 = vxpose.xlu0.b32.end [16/16] 0.0, 128
    %v809 = vpop.trf.xlu0
    %v810 = vpop.trf.xlu0
    %v811 = vpop.trf.xlu0
    %v812 = vpop.trf.xlu0
    %v813 = vpop.trf.xlu0
    %v814 = vpop.trf.xlu0
    %v815 = vpop.trf.xlu0
    %v816 = vpop.trf.xlu0
    %v817 = vpop.trf.xlu0
    %v818 = vpop.trf.xlu0
    %v819 = vpop.trf.xlu0
    %v820 = vpop.trf.xlu0
    %v821 = vpop.trf.xlu0
    %v822 = vpop.trf.xlu0
    %v823 = vpop.trf.xlu0
    %v824 = vpop.trf.xlu0
    %vm825 = vcmask 130048
    %v827 = vsel %vm825, %v809, 0
    %829 = vmatprep.subr.mxu0 0.0
    %v830 = vand.u32 %v791, 4294901760
    %831 = vmatpush1.msra.mxu0 %v830
    %832 = vmatprep.subr.mxu0 0.0
    %v833 = vand.u32 %v792, 4294901760
    %834 = vmatpush1.msra.mxu0 %v833
    %835 = vmatprep.subr.mxu0 0.0
    %836 = vmatpush1.msra.mxu0 0.0
    %837 = vmatprep.subr.mxu0 0.0
    %838 = vmatpush1.msra.mxu0 0.0
    %839 = vmatprep.subr.mxu0 0.0
    %840 = vmatpush1.msra.mxu0 0.0
    %841 = vmatprep.subr.mxu0 0.0
    %842 = vmatpush1.msra.mxu0 0.0
    %843 = vmatprep.subr.mxu0 0.0
    %844 = vmatpush1.msra.mxu0 0.0
    %845 = vmatprep.subr.mxu0 0.0
    %846 = vmatpush1.msra.mxu0 0.0
    %847 = vmatprep.subr.mxu0 0.0
    %848 = vmatpush1.msra.mxu0 0.0
    %849 = vmatprep.subr.mxu0 0.0
    %850 = vmatpush1.msra.mxu0 0.0
    %851 = vmatprep.subr.mxu0 0.0
    %852 = vmatpush1.msra.mxu0 0.0
    %853 = vmatprep.subr.mxu0 0.0
    %854 = vmatpush1.msra.mxu0 0.0
    %855 = vmatprep.subr.mxu0 0.0
    %856 = vmatpush1.msra.mxu0 0.0
    %857 = vmatprep.subr.mxu0 0.0
    %858 = vmatpush1.msra.mxu0 0.0
    %859 = vmatprep.subr.mxu0 0.0
    %860 = vmatpush1.msra.mxu0 0.0
    %861 = vmatprep.subr.mxu0 0.0
    %862 = vmatpush1.msra.mxu0 0.0
    %863 = vmatprep.subr.mxu0 0.0
    %864 = vmatpush1.msra.mxu0 0.0
    %865 = vmatprep.subr.mxu0 0.0
    %866 = vmatpush1.msra.mxu0 0.0
    %867 = vmatprep.subr.mxu0 0.0
    %868 = vmatpush1.msra.mxu0 0.0
    %869 = vmatprep.subr.mxu0 0.0
    %870 = vmatpush1.msra.mxu0 0.0
    %871 = vmatprep.subr.mxu0 0.0
    %872 = vmatpush1.msra.mxu0 0.0
    %873 = vmatprep.subr.mxu0 0.0
    %874 = vmatpush1.msra.mxu0 0.0
    %875 = vmatprep.subr.mxu0 0.0
    %876 = vmatpush1.msra.mxu0 0.0
    %877 = vmatprep.subr.mxu0 0.0
    %878 = vmatpush1.msra.mxu0 0.0
    %879 = vmatprep.subr.mxu0 0.0
    %880 = vmatpush1.msra.mxu0 0.0
    %881 = vmatprep.subr.mxu0 0.0
    %882 = vmatpush1.msra.mxu0 0.0
    %883 = vmatprep.subr.mxu0 0.0
    %884 = vmatpush1.msra.mxu0 0.0
    %885 = vmatprep.subr.mxu0 0.0
    %886 = vmatpush1.msra.mxu0 0.0
    %887 = vmatprep.subr.mxu0 0.0
    %888 = vmatpush1.msra.mxu0 0.0
    %889 = vmatprep.subr.mxu0 0.0
    %890 = vmatpush1.msra.mxu0 0.0
    %891 = vmatprep.subr.mxu0 0.0
    %892 = vmatpush1.msra.mxu0 0.0
    %893 = vmatprep.subr.mxu0 0.0
    %894 = vmatpush1.msra.mxu0 0.0
    %895 = vmatprep.mubr.f32.mxu0 0.0
    %v896 = vand.u32 %v827, 4294901760
    %v897 = vsub.f32 %v827, %v896
    %v898 = vand.u32 %v897, 4294901760
    %v899 = vsub.f32 %v897, %v898
    %v900 = vand.u32 %v899, 4294901760
    %901 = vmatmul.mubr.f32.gmra.mrb[0].mxu0 %v900
    %v902 = vpop.f32.mrb[0].mxu0
    %v903 = vadd.f32 0.0, %v902
    %v904 = vpop.f32.mrb[0].mxu0
    %905 = vdwg.mxu0
    %906 = vmatprep.subr.mxu0 0.0
    %v907 = vand.u32 %v791, 4294901760
    %v908 = vsub.f32 %v791, %v907
    %v909 = vand.u32 %v908, 4294901760
    %v910 = vsub.f32 %v908, %v909
    %v911 = vand.u32 %v910, 4294901760
    %912 = vmatpush1.msra.mxu0 %v911
    %913 = vmatprep.subr.mxu0 0.0
    %v914 = vand.u32 %v792, 4294901760
    %v915 = vsub.f32 %v792, %v914
    %v916 = vand.u32 %v915, 4294901760
    %v917 = vsub.f32 %v915, %v916
    %v918 = vand.u32 %v917, 4294901760
    %919 = vmatpush1.msra.mxu0 %v918
    %920 = vmatprep.subr.mxu0 0.0
    %921 = vmatpush1.msra.mxu0 0.0
    %922 = vmatprep.subr.mxu0 0.0
    %923 = vmatpush1.msra.mxu0 0.0
    %924 = vmatprep.subr.mxu0 0.0
    %925 = vmatpush1.msra.mxu0 0.0
    %926 = vmatprep.subr.mxu0 0.0
    %927 = vmatpush1.msra.mxu0 0.0
    %928 = vmatprep.subr.mxu0 0.0
    %929 = vmatpush1.msra.mxu0 0.0
    %930 = vmatprep.subr.mxu0 0.0
    %931 = vmatpush1.msra.mxu0 0.0
    %932 = vmatprep.subr.mxu0 0.0
    %933 = vmatpush1.msra.mxu0 0.0
    %934 = vmatprep.subr.mxu0 0.0
    %935 = vmatpush1.msra.mxu0 0.0
    %936 = vmatprep.subr.mxu0 0.0
    %937 = vmatpush1.msra.mxu0 0.0
    %938 = vmatprep.subr.mxu0 0.0
    %939 = vmatpush1.msra.mxu0 0.0
    %940 = vmatprep.subr.mxu0 0.0
    %941 = vmatpush1.msra.mxu0 0.0
    %942 = vmatprep.subr.mxu0 0.0
    %943 = vmatpush1.msra.mxu0 0.0
    %944 = vmatprep.subr.mxu0 0.0
    %945 = vmatpush1.msra.mxu0 0.0
    %946 = vmatprep.subr.mxu0 0.0
    %947 = vmatpush1.msra.mxu0 0.0
    %948 = vmatprep.subr.mxu0 0.0
    %949 = vmatpush1.msra.mxu0 0.0
    %950 = vmatprep.subr.mxu0 0.0
    %951 = vmatpush1.msra.mxu0 0.0
    %952 = vmatprep.subr.mxu0 0.0
    %953 = vmatpush1.msra.mxu0 0.0
    %954 = vmatprep.subr.mxu0 0.0
    %955 = vmatpush1.msra.mxu0 0.0
    %956 = vmatprep.subr.mxu0 0.0
    %957 = vmatpush1.msra.mxu0 0.0
    %958 = vmatprep.subr.mxu0 0.0
    %959 = vmatpush1.msra.mxu0 0.0
    %960 = vmatprep.subr.mxu0 0.0
    %961 = vmatpush1.msra.mxu0 0.0
    %962 = vmatprep.subr.mxu0 0.0
    %963 = vmatpush1.msra.mxu0 0.0
    %964 = vmatprep.subr.mxu0 0.0
    %965 = vmatpush1.msra.mxu0 0.0
    %966 = vmatprep.subr.mxu0 0.0
    %967 = vmatpush1.msra.mxu0 0.0
    %968 = vmatprep.subr.mxu0 0.0
    %969 = vmatpush1.msra.mxu0 0.0
    %970 = vmatprep.subr.mxu0 0.0
    %971 = vmatpush1.msra.mxu0 0.0
    %972 = vmatprep.subr.mxu0 0.0
    %973 = vmatpush1.msra.mxu0 0.0
    %974 = vmatprep.subr.mxu0 0.0
    %975 = vmatpush1.msra.mxu0 0.0
    %976 = vmatprep.subr.mxu0 0.0
    %977 = vmatpush1.msra.mxu0 0.0
    %978 = vmatprep.subr.mxu0 0.0
    %979 = vmatpush1.msra.mxu0 0.0
    %980 = vmatprep.mubr.f32.mxu0 0.0
    %v981 = vand.u32 %v827, 4294901760
    %982 = vmatmul.mubr.f32.gmra.mrb[0].mxu0 %v981
    %v983 = vpop.f32.mrb[0].mxu0
    %v984 = vadd.f32 %v903, %v983
    %v985 = vpop.f32.mrb[0].mxu0
    %986 = vdwg.mxu0
    %987 = vmatprep.subr.mxu0 0.0
    %v988 = vand.u32 %v791, 4294901760
    %v989 = vsub.f32 %v791, %v988
    %990 = vmatpush1.msra.mxu0 %v989
    %991 = vmatprep.subr.mxu0 0.0
    %v992 = vand.u32 %v792, 4294901760
    %v993 = vsub.f32 %v792, %v992
    %994 = vmatpush1.msra.mxu0 %v993
    %995 = vmatprep.subr.mxu0 0.0
    %996 = vmatpush1.msra.mxu0 0.0
    %997 = vmatprep.subr.mxu0 0.0
    %998 = vmatpush1.msra.mxu0 0.0
    %999 = vmatprep.subr.mxu0 0.0
    %1000 = vmatpush1.msra.mxu0 0.0
    %1001 = vmatprep.subr.mxu0 0.0
    %1002 = vmatpush1.msra.mxu0 0.0
    %1003 = vmatprep.subr.mxu0 0.0
    %1004 = vmatpush1.msra.mxu0 0.0
    %1005 = vmatprep.subr.mxu0 0.0
    %1006 = vmatpush1.msra.mxu0 0.0
    %1007 = vmatprep.subr.mxu0 0.0
    %1008 = vmatpush1.msra.mxu0 0.0
    %1009 = vmatprep.subr.mxu0 0.0
    %1010 = vmatpush1.msra.mxu0 0.0
    %1011 = vmatprep.subr.mxu0 0.0
    %1012 = vmatpush1.msra.mxu0 0.0
    %1013 = vmatprep.subr.mxu0 0.0
    %1014 = vmatpush1.msra.mxu0 0.0
    %1015 = vmatprep.subr.mxu0 0.0
    %1016 = vmatpush1.msra.mxu0 0.0
    %1017 = vmatprep.subr.mxu0 0.0
    %1018 = vmatpush1.msra.mxu0 0.0
    %1019 = vmatprep.subr.mxu0 0.0
    %1020 = vmatpush1.msra.mxu0 0.0
    %1021 = vmatprep.subr.mxu0 0.0
    %1022 = vmatpush1.msra.mxu0 0.0
    %1023 = vmatprep.subr.mxu0 0.0
    %1024 = vmatpush1.msra.mxu0 0.0
    %1025 = vmatprep.subr.mxu0 0.0
    %1026 = vmatpush1.msra.mxu0 0.0
    %1027 = vmatprep.subr.mxu0 0.0
    %1028 = vmatpush1.msra.mxu0 0.0
    %1029 = vmatprep.subr.mxu0 0.0
    %1030 = vmatpush1.msra.mxu0 0.0
    %1031 = vmatprep.subr.mxu0 0.0
    %1032 = vmatpush1.msra.mxu0 0.0
    %1033 = vmatprep.subr.mxu0 0.0
    %1034 = vmatpush1.msra.mxu0 0.0
    %1035 = vmatprep.subr.mxu0 0.0
    %1036 = vmatpush1.msra.mxu0 0.0
    %1037 = vmatprep.subr.mxu0 0.0
    %1038 = vmatpush1.msra.mxu0 0.0
    %1039 = vmatprep.subr.mxu0 0.0
    %1040 = vmatpush1.msra.mxu0 0.0
    %1041 = vmatprep.subr.mxu0 0.0
    %1042 = vmatpush1.msra.mxu0 0.0
    %1043 = vmatprep.subr.mxu0 0.0
    %1044 = vmatpush1.msra.mxu0 0.0
    %1045 = vmatprep.subr.mxu0 0.0
    %1046 = vmatpush1.msra.mxu0 0.0
    %1047 = vmatprep.subr.mxu0 0.0
    %1048 = vmatpush1.msra.mxu0 0.0
    %1049 = vmatprep.subr.mxu0 0.0
    %1050 = vmatpush1.msra.mxu0 0.0
    %1051 = vmatprep.subr.mxu0 0.0
    %1052 = vmatpush1.msra.mxu0 0.0
    %1053 = vmatprep.subr.mxu0 0.0
    %1054 = vmatpush1.msra.mxu0 0.0
    %1055 = vmatprep.mubr.f32.mxu0 0.0
    %v1056 = vand.u32 %v827, 4294901760
    %v1057 = vsub.f32 %v827, %v1056
    %1058 = vmatmul.mubr.f32.gmra.mrb[0].mxu0 %v1057
    %v1059 = vpop.f32.mrb[0].mxu0
    %v1060 = vadd.f32 %v984, %v1059
    %v1061 = vpop.f32.mrb[0].mxu0
    %1062 = vdwg.mxu0
    %1063 = vmatprep.subr.mxu0 0.0
    %v1064 = vand.u32 %v791, 4294901760
    %1065 = vmatpush1.msra.mxu0 %v1064
    %1066 = vmatprep.subr.mxu0 0.0
    %v1067 = vand.u32 %v792, 4294901760
    %1068 = vmatpush1.msra.mxu0 %v1067
    %1069 = vmatprep.subr.mxu0 0.0
    %1070 = vmatpush1.msra.mxu0 0.0
    %1071 = vmatprep.subr.mxu0 0.0
    %1072 = vmatpush1.msra.mxu0 0.0
    %1073 = vmatprep.subr.mxu0 0.0
    %1074 = vmatpush1.msra.mxu0 0.0
    %1075 = vmatprep.subr.mxu0 0.0
    %1076 = vmatpush1.msra.mxu0 0.0
    %1077 = vmatprep.subr.mxu0 0.0
    %1078 = vmatpush1.msra.mxu0 0.0
    %1079 = vmatprep.subr.mxu0 0.0
    %1080 = vmatpush1.msra.mxu0 0.0
    %1081 = vmatprep.subr.mxu0 0.0
    %1082 = vmatpush1.msra.mxu0 0.0
    %1083 = vmatprep.subr.mxu0 0.0
    %1084 = vmatpush1.msra.mxu0 0.0
    %1085 = vmatprep.subr.mxu0 0.0
    %1086 = vmatpush1.msra.mxu0 0.0
    %1087 = vmatprep.subr.mxu0 0.0
    %1088 = vmatpush1.msra.mxu0 0.0
    %1089 = vmatprep.subr.mxu0 0.0
    %1090 = vmatpush1.msra.mxu0 0.0
    %1091 = vmatprep.subr.mxu0 0.0
    %1092 = vmatpush1.msra.mxu0 0.0
    %1093 = vmatprep.subr.mxu0 0.0
    %1094 = vmatpush1.msra.mxu0 0.0
    %1095 = vmatprep.subr.mxu0 0.0
    %1096 = vmatpush1.msra.mxu0 0.0
    %1097 = vmatprep.subr.mxu0 0.0
    %1098 = vmatpush1.msra.mxu0 0.0
    %1099 = vmatprep.subr.mxu0 0.0
    %1100 = vmatpush1.msra.mxu0 0.0
    %1101 = vmatprep.subr.mxu0 0.0
    %1102 = vmatpush1.msra.mxu0 0.0
    %1103 = vmatprep.subr.mxu0 0.0
    %1104 = vmatpush1.msra.mxu0 0.0
    %1105 = vmatprep.subr.mxu0 0.0
    %1106 = vmatpush1.msra.mxu0 0.0
    %1107 = vmatprep.subr.mxu0 0.0
    %1108 = vmatpush1.msra.mxu0 0.0
    %1109 = vmatprep.subr.mxu0 0.0
    %1110 = vmatpush1.msra.mxu0 0.0
    %1111 = vmatprep.subr.mxu0 0.0
    %1112 = vmatpush1.msra.mxu0 0.0
    %1113 = vmatprep.subr.mxu0 0.0
    %1114 = vmatpush1.msra.mxu0 0.0
    %1115 = vmatprep.subr.mxu0 0.0
    %1116 = vmatpush1.msra.mxu0 0.0
    %1117 = vmatprep.subr.mxu0 0.0
    %1118 = vmatpush1.msra.mxu0 0.0
    %1119 = vmatprep.subr.mxu0 0.0
    %1120 = vmatpush1.msra.mxu0 0.0
    %1121 = vmatprep.subr.mxu0 0.0
    %1122 = vmatpush1.msra.mxu0 0.0
    %1123 = vmatprep.subr.mxu0 0.0
    %1124 = vmatpush1.msra.mxu0 0.0
    %1125 = vmatprep.subr.mxu0 0.0
    %1126 = vmatpush1.msra.mxu0 0.0
    %1127 = vmatprep.subr.mxu0 0.0
    %1128 = vmatpush1.msra.mxu0 0.0
    %1129 = vmatprep.mubr.f32.mxu0 0.0
    %v1130 = vand.u32 %v827, 4294901760
    %v1131 = vsub.f32 %v827, %v1130
    %v1132 = vand.u32 %v1131, 4294901760
    %1133 = vmatmul.mubr.f32.gmra.mrb[0].mxu0 %v1132
    %v1134 = vpop.f32.mrb[0].mxu0
    %v1135 = vadd.f32 %v1060, %v1134
    %v1136 = vpop.f32.mrb[0].mxu0
    %1137 = vdwg.mxu0
    %1138 = vmatprep.subr.mxu0 0.0
    %v1139 = vand.u32 %v791, 4294901760
    %v1140 = vsub.f32 %v791, %v1139
    %v1141 = vand.u32 %v1140, 4294901760
    %1142 = vmatpush1.msra.mxu0 %v1141
    %1143 = vmatprep.subr.mxu0 0.0
    %v1144 = vand.u32 %v792, 4294901760
    %v1145 = vsub.f32 %v792, %v1144
    %v1146 = vand.u32 %v1145, 4294901760
    %1147 = vmatpush1.msra.mxu0 %v1146
    %1148 = vmatprep.subr.mxu0 0.0
    %1149 = vmatpush1.msra.mxu0 0.0
    %1150 = vmatprep.subr.mxu0 0.0
    %1151 = vmatpush1.msra.mxu0 0.0
    %1152 = vmatprep.subr.mxu0 0.0
    %1153 = vmatpush1.msra.mxu0 0.0
    %1154 = vmatprep.subr.mxu0 0.0
    %1155 = vmatpush1.msra.mxu0 0.0
    %1156 = vmatprep.subr.mxu0 0.0
    %1157 = vmatpush1.msra.mxu0 0.0
    %1158 = vmatprep.subr.mxu0 0.0
    %1159 = vmatpush1.msra.mxu0 0.0
    %1160 = vmatprep.subr.mxu0 0.0
    %1161 = vmatpush1.msra.mxu0 0.0
    %1162 = vmatprep.subr.mxu0 0.0
    %1163 = vmatpush1.msra.mxu0 0.0
    %1164 = vmatprep.subr.mxu0 0.0
    %1165 = vmatpush1.msra.mxu0 0.0
    %1166 = vmatprep.subr.mxu0 0.0
    %1167 = vmatpush1.msra.mxu0 0.0
    %1168 = vmatprep.subr.mxu0 0.0
    %1169 = vmatpush1.msra.mxu0 0.0
    %1170 = vmatprep.subr.mxu0 0.0
    %1171 = vmatpush1.msra.mxu0 0.0
    %1172 = vmatprep.subr.mxu0 0.0
    %1173 = vmatpush1.msra.mxu0 0.0
    %1174 = vmatprep.subr.mxu0 0.0
    %1175 = vmatpush1.msra.mxu0 0.0
    %1176 = vmatprep.subr.mxu0 0.0
    %1177 = vmatpush1.msra.mxu0 0.0
    %1178 = vmatprep.subr.mxu0 0.0
    %1179 = vmatpush1.msra.mxu0 0.0
    %1180 = vmatprep.subr.mxu0 0.0
    %1181 = vmatpush1.msra.mxu0 0.0
    %1182 = vmatprep.subr.mxu0 0.0
    %1183 = vmatpush1.msra.mxu0 0.0
    %1184 = vmatprep.subr.mxu0 0.0
    %1185 = vmatpush1.msra.mxu0 0.0
    %1186 = vmatprep.subr.mxu0 0.0
    %1187 = vmatpush1.msra.mxu0 0.0
    %1188 = vmatprep.subr.mxu0 0.0
    %1189 = vmatpush1.msra.mxu0 0.0
    %1190 = vmatprep.subr.mxu0 0.0
    %1191 = vmatpush1.msra.mxu0 0.0
    %1192 = vmatprep.subr.mxu0 0.0
    %1193 = vmatpush1.msra.mxu0 0.0
    %1194 = vmatprep.subr.mxu0 0.0
    %1195 = vmatpush1.msra.mxu0 0.0
    %1196 = vmatprep.subr.mxu0 0.0
    %1197 = vmatpush1.msra.mxu0 0.0
    %1198 = vmatprep.subr.mxu0 0.0
    %1199 = vmatpush1.msra.mxu0 0.0
    %1200 = vmatprep.subr.mxu0 0.0
    %1201 = vmatpush1.msra.mxu0 0.0
    %1202 = vmatprep.subr.mxu0 0.0
    %1203 = vmatpush1.msra.mxu0 0.0
    %1204 = vmatprep.subr.mxu0 0.0
    %1205 = vmatpush1.msra.mxu0 0.0
    %1206 = vmatprep.subr.mxu0 0.0
    %1207 = vmatpush1.msra.mxu0 0.0
    %1208 = vmatprep.mubr.f32.mxu0 0.0
    %v1209 = vand.u32 %v827, 4294901760
    %1210 = vmatmul.mubr.f32.gmra.mrb[0].mxu0 %v1209
    %v1211 = vpop.f32.mrb[0].mxu0
    %v1212 = vadd.f32 %v1135, %v1211
    %v1213 = vpop.f32.mrb[0].mxu0
    %1214 = vdwg.mxu0
    %1215 = vmatprep.subr.mxu0 0.0
    %v1216 = vand.u32 %v791, 4294901760
    %1217 = vmatpush1.msra.mxu0 %v1216
    %1218 = vmatprep.subr.mxu0 0.0
    %v1219 = vand.u32 %v792, 4294901760
    %1220 = vmatpush1.msra.mxu0 %v1219
    %1221 = vmatprep.subr.mxu0 0.0
    %1222 = vmatpush1.msra.mxu0 0.0
    %1223 = vmatprep.subr.mxu0 0.0
    %1224 = vmatpush1.msra.mxu0 0.0
    %1225 = vmatprep.subr.mxu0 0.0
    %1226 = vmatpush1.msra.mxu0 0.0
    %1227 = vmatprep.subr.mxu0 0.0
    %1228 = vmatpush1.msra.mxu0 0.0
    %1229 = vmatprep.subr.mxu0 0.0
    %1230 = vmatpush1.msra.mxu0 0.0
    %1231 = vmatprep.subr.mxu0 0.0
    %1232 = vmatpush1.msra.mxu0 0.0
    %1233 = vmatprep.subr.mxu0 0.0
    %1234 = vmatpush1.msra.mxu0 0.0
    %1235 = vmatprep.subr.mxu0 0.0
    %1236 = vmatpush1.msra.mxu0 0.0
    %1237 = vmatprep.subr.mxu0 0.0
    %1238 = vmatpush1.msra.mxu0 0.0
    %1239 = vmatprep.subr.mxu0 0.0
    %1240 = vmatpush1.msra.mxu0 0.0
    %1241 = vmatprep.subr.mxu0 0.0
    %1242 = vmatpush1.msra.mxu0 0.0
    %1243 = vmatprep.subr.mxu0 0.0
    %1244 = vmatpush1.msra.mxu0 0.0
    %1245 = vmatprep.subr.mxu0 0.0
    %1246 = vmatpush1.msra.mxu0 0.0
    %1247 = vmatprep.subr.mxu0 0.0
    %1248 = vmatpush1.msra.mxu0 0.0
    %1249 = vmatprep.subr.mxu0 0.0
    %1250 = vmatpush1.msra.mxu0 0.0
    %1251 = vmatprep.subr.mxu0 0.0
    %1252 = vmatpush1.msra.mxu0 0.0
    %1253 = vmatprep.subr.mxu0 0.0
    %1254 = vmatpush1.msra.mxu0 0.0
    %1255 = vmatprep.subr.mxu0 0.0
    %1256 = vmatpush1.msra.mxu0 0.0
    %1257 = vmatprep.subr.mxu0 0.0
    %1258 = vmatpush1.msra.mxu0 0.0
    %1259 = vmatprep.subr.mxu0 0.0
    %1260 = vmatpush1.msra.mxu0 0.0
    %1261 = vmatprep.subr.mxu0 0.0
    %1262 = vmatpush1.msra.mxu0 0.0
    %1263 = vmatprep.subr.mxu0 0.0
    %1264 = vmatpush1.msra.mxu0 0.0
    %1265 = vmatprep.subr.mxu0 0.0
    %1266 = vmatpush1.msra.mxu0 0.0
    %1267 = vmatprep.subr.mxu0 0.0
    %1268 = vmatpush1.msra.mxu0 0.0
    %1269 = vmatprep.subr.mxu0 0.0
    %1270 = vmatpush1.msra.mxu0 0.0
    %1271 = vmatprep.subr.mxu0 0.0
    %1272 = vmatpush1.msra.mxu0 0.0
    %1273 = vmatprep.subr.mxu0 0.0
    %1274 = vmatpush1.msra.mxu0 0.0
    %1275 = vmatprep.subr.mxu0 0.0
    %1276 = vmatpush1.msra.mxu0 0.0
    %1277 = vmatprep.subr.mxu0 0.0
    %1278 = vmatpush1.msra.mxu0 0.0
    %1279 = vmatprep.subr.mxu0 0.0
    %1280 = vmatpush1.msra.mxu0 0.0
    %1281 = vmatprep.mubr.f32.mxu0 0.0
    %v1282 = vand.u32 %v827, 4294901760
    %1283 = vmatmul.mubr.f32.gmra.mrb[0].mxu0 %v1282
    %v1284 = vpop.f32.mrb[0].mxu0
    %v1285 = vadd.f32 %v1212, %v1284
    %v1286 = vpop.f32.mrb[0].mxu0
    %1287 = vdwg.mxu0
    %v1288 = vadd.f32 %v39, %v1285
    %1289 = vst.msk [vmem:[#allocation6] sm:$0xff] %vm54, %v1288
    %v1290 = vmul.f32 %v789, %v789
    %v1291 = vmul.f32 %v790, %v790
    %v1292 = vsub.f32 1.0, %v1290
    %v1293 = vsub.f32 1.0, %v1291
    %v1294 = vld [vmem:[%s4] sm:$0xff]
    %v1295 = vld [vmem:[%s4 + $0x8] sm:$0xff]
    %1297 = vset.pattern.permute.xlu0 0
    %1298 = vperm.xlu0 %1297, %v1294
    %v1299 = vpop.permute.xlu0 %1298
    %1302 = vset.pattern.permute.xlu0 0
    %1303 = vperm.xlu0 %1302, %v1295
    %v1304 = vpop.permute.xlu0 %1303
    %v1306 = vmul.f32 %v1292, %v1299
    %v1307 = vmul.f32 %v1293, %v1304
    %v1308 = vadd.f32 %v1306, 1.0
    %v1309 = vadd.f32 %v1307, 1.0
    %v1310 = vand.u32 2147483647, %v1308
    %v1311 = vand.u32 2147483647, %v1309
    %v1312 = vadd.f32 %v1310, 1e-15
    %v1313 = vadd.f32 %v1311, 1e-15
    %v1314 = vlog2.pop %v1312
    %v1315 = vmul.f32 %v1314, 0.6931472
    %v1316 = vlog2.pop %v1313
    %v1317 = vmul.f32 %v1316, 0.6931472
    %vm1318 = vcmask 64512
    %v1319 = vsel %vm1318, %v1315, 0.0
    %v1320 = vsel %vm1318, %v1317, 0.0
    %v1321 = vadd.f32 %v1319, %v1320
    %v1322 = vrot.slane %v1321, 4
    %v1323 = vadd.f32 %v1321, %v1322
    %v1324 = vrot.slane %v1323, 2
    %v1325 = vadd.f32 %v1323, %v1324
    %v1326 = vrot.slane %v1325, 1
    %v1327 = vadd.f32 %v1325, %v1326
    %1328 = vst.msk [vmem:[#allocation7] sm:$0x1] %vm556, %v1327
    // Predicated region
    $region30: #{tpu_custom_call.1} parent=1 // pred_check
      _
    $region31: #{tpu_custom_call.1} parent=1 // pred_check_branch
      %1330 = sbr.rel (0) target = $region33
    $region32: #{tpu_custom_call.1} parent=1 // pred_region
      %s1332 = ssub.s32 128, 128
      %1333 = vsyncadd [#allocation5], %s1332
      %s1335 = sshll.u32 [#allocation6], 4
      %s1336 = int_to_ptr.vmem [resolvable:$true] %s1335
      %1338 = dma.vmem_to_hbm [thread:$0]  %s1336, 128, %s6, [#allocation5]
    $region33: #{tpu_custom_call.1} parent=1 // pred_fallthru
      _
    // Predicated region
    $region34: #{tpu_custom_call.1} parent=1 // pred_check
      _
    $region35: #{tpu_custom_call.1} parent=1 // pred_check_branch
      %1340 = sbr.rel (0) target = $region37
    $region36: #{tpu_custom_call.1} parent=1 // pred_region
      %s1342 = ssub.s32 16, 16
      %1343 = vsyncadd [#allocation8], %s1342
      %s1345 = sshll.u32 [#allocation7], 4
      %s1346 = int_to_ptr.vmem [resolvable:$true] %s1345
      %1348 = dma.vmem_to_hbm [thread:$0]  %s1346, 16, %s7, [#allocation8]
    $region37: #{tpu_custom_call.1} parent=1 // pred_fallthru
      _
    // Predicated region
    $region38: #{tpu_custom_call.1} parent=1 // pred_check
      _
    $region39: #{tpu_custom_call.1} parent=1 // pred_check_branch
      %1350 = sbr.rel (0) target = $region41
    $region40: #{tpu_custom_call.1} parent=1 // pred_region
      %1351 = dma.done [#allocation5], 128
    $region41: #{tpu_custom_call.1} parent=1 // pred_fallthru
      _
    // Predicated region
    $region42: #{tpu_custom_call.1} parent=1 // pred_check
      _
    $region43: #{tpu_custom_call.1} parent=1 // pred_check_branch
      %1353 = sbr.rel (0) target = $region45
    $region44: #{tpu_custom_call.1} parent=1 // pred_region
      %1354 = dma.done [#allocation8], 16
    $region45: #{tpu_custom_call.1} parent=1 // pred_fallthru
      _
    %1355 = vsyncpa [#allocation4], 1
    %1356 = vsyncpa [#allocation5], 1
    %1357 = vsyncpa [#allocation8], 1

</llo_original>
